<compile_context>
chip_gen: v7x
topology: tpu7x:2x2x1
jax: 0.10.0
libtpu: 0.0.40
codegen_flags: <defaults>
</compile_context>

<pallas_src>
from functools import partial

import jax
import jax.numpy as jnp
from jax.experimental import pallas as pl
from jax.experimental.pallas import tpu as pltpu

# --------------------- small hyperparameters (per CDVAE.__init__) -------------
BATCH = 2
SEQ = 8                       # encoder seq len; decoder/target seq len = SEQ + 1
TDEC = SEQ + 1                # 9
TPAD = 16                     # decoder rows per sentence, padded to multiple of 8
EMBED = 16                    # params.embed_size
ENC_SIZE = 32                 # params.encoder_size
DEC_SIZE = 32                 # params.decoder_size
LATENT = 8                    # params.latent_variable_size
VOCAB = {"ru": 32, "en": 40}  # params.vocab_size
VPAD = 128                    # both vocabularies lane-padded to one width

NE = BATCH * SEQ              # 16 encoder token rows
NTP = BATCH * TPAD            # 32 padded decoder token rows
NIDS = NE + 2 * NTP           # 80 packed int rows (enc | dec | tgt)

# Packed parameter-buffer row layout (width = 128 lanes, f32).
R_ENC_TAB = 0                         # [VPAD, ENC]  = embed @ enc_w
R_DEC_TAB = R_ENC_TAB + VPAD          # [VPAD, DEC]  = embed @ dec_w1[:EMBED]
R_W2 = R_DEC_TAB + VPAD               # [DEC, VPAD]  decoder output weight
R_BIAS = R_W2 + DEC_SIZE              # 8 bias rows (enc_b / mu|lv_b / b1 / b2)
R_MULV_W = R_BIAS + 8                 # [ENC, 2*LATENT] fused mu|logvar head
R_W1Z = R_MULV_W + ENC_SIZE           # [LATENT, DEC]  z -> decoder hidden
PROWS = R_W1Z + LATENT                # 336 rows total


# ------------------------------- fused Pallas kernel --------------------------

def _cdvae_kernel(p_ref, ids_ref, fv_ref, eps_ref, scal_ref, mulv_ref):
    """One grid step == one language (ru or en)."""
    f32 = jnp.float32

    # ---------------- encoder: one-hot histogram + folded linear -------------
    # TODO(synk): original VAE uses an RNN encoder (class not in the provided
    # source); approximated with a mean-pool encoder.
    enc_ids = ids_ref[0, 0:NE, :]                                   # [NE, 1] i32
    col_e = jax.lax.broadcasted_iota(jnp.int32, (NE, VPAD), 1)
    onehot_e = (col_e == enc_ids).astype(f32)                       # [NE, VPAD]

    # Mean-pool matrix P[b, r] = 1/SEQ for r in [b*SEQ, (b+1)*SEQ).
    pr = jax.lax.broadcasted_iota(jnp.int32, (BATCH, NE), 1)
    pb = jax.lax.broadcasted_iota(jnp.int32, (BATCH, NE), 0)
    pool = ((pr >= pb * SEQ) & (pr < (pb + 1) * SEQ)).astype(f32) * (1.0 / SEQ)
    hist = jnp.dot(pool, onehot_e, preferred_element_type=f32)      # [B, VPAD]

    enc_tab = p_ref[0, R_ENC_TAB:R_ENC_TAB + VPAD, 0:ENC_SIZE]      # [VPAD, ENC]
    enc_b = p_ref[0, R_BIAS:R_BIAS + 1, 0:ENC_SIZE]                 # [1, ENC]
    ctx = jnp.tanh(jnp.dot(hist, enc_tab, preferred_element_type=f32) + enc_b)

    # Fused mu|logvar head.
    mulv_w = p_ref[0, R_MULV_W:R_MULV_W + ENC_SIZE, 0:2 * LATENT]   # [ENC, 2L]
    mulv_b = p_ref[0, R_BIAS + 1:R_BIAS + 2, 0:2 * LATENT]          # [1, 2L]
    mu_lv = jnp.dot(ctx, mulv_w, preferred_element_type=f32) + mulv_b
    mu = mu_lv[:, 0:LATENT]                                         # [B, L]
    logvar = mu_lv[:, LATENT:2 * LATENT]                            # [B, L]
    z = mu + jnp.exp(0.5 * logvar) * eps_ref[0]                     # [B, L]

    # ---------------- decoder: per-token MLP conditioned on z ----------------
    dec_ids = ids_ref[0, NE:NE + NTP, :]                            # [NTP, 1]
    tgt_ids = ids_ref[0, NE + NTP:NE + 2 * NTP, :]                  # [NTP, 1]
    keep = fv_ref[0, 0:NTP, :]                                      # [NTP, 1]
    weight = fv_ref[0, NTP:2 * NTP, :]                              # [NTP, 1]

    col_d = jax.lax.broadcasted_iota(jnp.int32, (NTP, VPAD), 1)
    onehot_d = (col_d == dec_ids).astype(f32)                       # [NTP, VPAD]

    dec_tab = p_ref[0, R_DEC_TAB:R_DEC_TAB + VPAD, 0:DEC_SIZE]      # [VPAD, DEC]
    emb_h = jnp.dot(onehot_d, dec_tab, preferred_element_type=f32) * keep

    w1z = p_ref[0, R_W1Z:R_W1Z + LATENT, 0:DEC_SIZE]                # [L, DEC]
    hz = jnp.dot(z, w1z, preferred_element_type=f32)                # [B, DEC]
    # Sublane broadcast of z-contribution over the TPAD rows of each sentence
    # (replaces the old K=2 replicate matmul).
    hz_rep = jnp.concatenate(
        [jnp.broadcast_to(hz[b:b + 1, :], (TPAD, DEC_SIZE)) for b in range(BATCH)],
        axis=0)                                                     # [NTP, DEC]

    b1 = p_ref[0, R_BIAS + 2:R_BIAS + 3, 0:DEC_SIZE]                # [1, DEC]
    h = jnp.tanh(emb_h + hz_rep + b1)                               # [NTP, DEC]

    w2 = p_ref[0, R_W2:R_W2 + DEC_SIZE, 0:VPAD]                     # [DEC, VPAD]
    b2 = p_ref[0, R_BIAS + 3:R_BIAS + 4, 0:VPAD]                    # [1, VPAD], pad lanes = -1e30
    logits = jnp.dot(h, w2, preferred_element_type=f32) + b2        # [NTP, VPAD]

    # ---------------- losses --------------------------------------------------
    # Cross entropy: padded vocab lanes carry -1e30 from b2 -> exp underflows
    # to 0, no explicit mask needed.  Padded token rows carry weight 0.
    m = jnp.max(logits, axis=-1, keepdims=True)
    lse = jnp.log(jnp.sum(jnp.exp(logits - m), axis=-1, keepdims=True)) + m
    tgt_logit = jnp.sum(jnp.where(col_d == tgt_ids, logits, 0.0),
                        axis=-1, keepdims=True)
    ce = jnp.sum(weight * (lse - tgt_logit), axis=0, keepdims=True) \
        * (1.0 / float(BATCH * TDEC))                               # [1, 1]

    # latent_loss: (-0.5 * sum(logvar - mu^2 - exp(logvar) + 1, dim=1)).mean()
    kld_b = -0.5 * jnp.sum(logvar - mu * mu - jnp.exp(logvar) + 1.0,
                           axis=1, keepdims=True)                   # [B, 1]
    kld = jnp.sum(kld_b, axis=0, keepdims=True) * (1.0 / float(BATCH))

    scal_ref[0] = jnp.concatenate([ce, kld], axis=1)                # [1, 2]
    mulv_ref[0] = mu_lv                                             # [B, 2L]


def _cdvae_fused(packed, ids, fvals, eps):
    scal, mulv = pl.pallas_call(
        _cdvae_kernel,
        out_shape=(jax.ShapeDtypeStruct((2, 1, 2), jnp.float32),
                   jax.ShapeDtypeStruct((2, BATCH, 2 * LATENT), jnp.float32)),
        grid=(2,),
        in_specs=[
            pl.BlockSpec((1, PROWS, 128), lambda l: (l, 0, 0)),
            pl.BlockSpec((1, NIDS, 1), lambda l: (l, 0, 0)),
            pl.BlockSpec((1, 2 * NTP, 1), lambda l: (l, 0, 0)),
            pl.BlockSpec((1, BATCH, LATENT), lambda l: (l, 0, 0)),
        ],
        out_specs=(
            pl.BlockSpec((1, 1, 2), lambda l: (l, 0, 0)),
            pl.BlockSpec((1, BATCH, 2 * LATENT), lambda l: (l, 0, 0)),
        ),
        compiler_params=pltpu.CompilerParams(dimension_semantics=("parallel",)),
    )(packed, ids, fvals, eps)
    return scal, mulv


# ------------------------------- params ---------------------------------------

def init_vae_params(key, vocab):
    ks = jax.random.split(key, 6)
    s = 0.05
    return {
        "embed":  s * jax.random.normal(ks[0], (vocab, EMBED), jnp.float32),
        "enc_w":  s * jax.random.normal(ks[1], (EMBED, ENC_SIZE), jnp.float32),
        "enc_b":  jnp.zeros((ENC_SIZE,), jnp.float32),
        "mu_w":   s * jax.random.normal(ks[2], (ENC_SIZE, LATENT), jnp.float32),
        "mu_b":   jnp.zeros((LATENT,), jnp.float32),
        "lv_w":   s * jax.random.normal(ks[3], (ENC_SIZE, LATENT), jnp.float32),
        "lv_b":   jnp.zeros((LATENT,), jnp.float32),
        "dec_w1": s * jax.random.normal(ks[4], (EMBED + LATENT, DEC_SIZE), jnp.float32),
        "dec_b1": jnp.zeros((DEC_SIZE,), jnp.float32),
        "dec_w2": s * jax.random.normal(ks[5], (DEC_SIZE, vocab), jnp.float32),
        "dec_b2": jnp.zeros((vocab,), jnp.float32),
    }


def _pack_one(p, vsize):
    """Fold and pack one language's parameters into a [PROWS, 128] f32 buffer."""
    embed_pad = jnp.pad(p["embed"], ((0, VPAD - vsize), (0, 0)))        # [VPAD, E]
    enc_tab = embed_pad @ p["enc_w"]                                    # [VPAD, ENC]
    dec_tab = embed_pad @ p["dec_w1"][:EMBED]                           # [VPAD, DEC]
    w2 = jnp.pad(p["dec_w2"], ((0, 0), (0, VPAD - vsize)))              # [DEC, VPAD]
    b2 = jnp.concatenate(
        [p["dec_b2"], jnp.full((VPAD - vsize,), -1e30, jnp.float32)])   # [VPAD]
    mulv_w = jnp.concatenate([p["mu_w"], p["lv_w"]], axis=1)            # [ENC, 2L]
    mulv_b = jnp.concatenate([p["mu_b"], p["lv_b"]])                    # [2L]

    buf = jnp.zeros((PROWS, 128), jnp.float32)
    buf = buf.at[R_ENC_TAB:R_ENC_TAB + VPAD, :ENC_SIZE].set(enc_tab)
    buf = buf.at[R_DEC_TAB:R_DEC_TAB + VPAD, :DEC_SIZE].set(dec_tab)
    buf = buf.at[R_W2:R_W2 + DEC_SIZE, :VPAD].set(w2)
    buf = buf.at[R_BIAS, :ENC_SIZE].set(p["enc_b"])
    buf = buf.at[R_BIAS + 1, :2 * LATENT].set(mulv_b)
    buf = buf.at[R_BIAS + 2, :DEC_SIZE].set(p["dec_b1"])
    buf = buf.at[R_BIAS + 3, :VPAD].set(b2)
    buf = buf.at[R_MULV_W:R_MULV_W + ENC_SIZE, :2 * LATENT].set(mulv_w)
    buf = buf.at[R_W1Z:R_W1Z + LATENT, :DEC_SIZE].set(p["dec_w1"][EMBED:])
    return buf


def pack_params(p_ru, p_en):
    return jnp.stack([_pack_one(p_ru, VOCAB["ru"]), _pack_one(p_en, VOCAB["en"])])


# ------------------------------- CDVAE forward ---------------------------------

def _cd_latent_loss(mu1, lv1, mu2, lv2):
    # torch: 0.5 * t.sum(...)  -- full sum over batch AND latent dims; the
    # trailing .mean() on a 0-dim tensor is the identity, so no 1/BATCH here.
    den = jnp.exp(lv2) + 1e-8
    return 0.5 * jnp.sum(lv2 - lv1 + jnp.exp(lv1) / den
                         + (mu1 - mu2) ** 2 / den - 1.0)


@partial(jax.jit, static_argnums=(1,))   # only drop_prob is static; i is traced
def cdvae_forward(packed, drop_prob, enc_ru, enc_en, dec_ru, dec_en,
                  tgt_ru, tgt_en, i, eps_ru, eps_en, drop_key):
    B, S = enc_ru.shape
    T = dec_ru.shape[1]

    enc_ids = jnp.stack([enc_ru, enc_en]).reshape(2, B * S, 1).astype(jnp.int32)

    def pad_t(x):   # [2, B, T] -> [2, B*TPAD, 1]
        return jnp.pad(x, ((0, 0), (0, 0), (0, TPAD - T))).reshape(2, B * TPAD, 1)

    dec_ids = pad_t(jnp.stack([dec_ru, dec_en])).astype(jnp.int32)
    tgt_ids = pad_t(jnp.stack([tgt_ru, tgt_en])).astype(jnp.int32)
    ids = jnp.concatenate([enc_ids, dec_ids, tgt_ids], axis=1)        # [2, 80, 1]

    if drop_prob > 0.0:
        # TODO(synk): original VAE applies word dropout inside its RNN decoder
        # (class not provided); approximated as a per-token keep mask on the
        # decoder embeddings, applied inside the fused kernel.
        keep = jax.random.bernoulli(drop_key, 1.0 - drop_prob, (2, B, TPAD))
        keep = keep.astype(jnp.float32) / (1.0 - drop_prob)
    else:
        keep = jnp.ones((2, B, TPAD), jnp.float32)
    keep = keep.reshape(2, B * TPAD, 1)
    weight = jnp.pad(jnp.ones((2, B, T), jnp.float32),
                     ((0, 0), (0, 0), (0, TPAD - T))).reshape(2, B * TPAD, 1)
    fvals = jnp.concatenate([keep, weight], axis=1)                   # [2, 64, 1]

    eps = jnp.stack([eps_ru, eps_en])                                 # [2, B, L]

    scal, mulv = _cdvae_fused(packed, ids, fvals, eps)
    ce_ru, kld_ru = scal[0, 0, 0], scal[0, 0, 1]
    ce_en, kld_en = scal[1, 0, 0], scal[1, 0, 1]
    mu = mulv[:, :, :LATENT]
    logvar = mulv[:, :, LATENT:]

    cd_kld_ru = _cd_latent_loss(mu[0], logvar[0], mu[1], logvar[1])
    cd_kld_en = _cd_latent_loss(mu[1], logvar[1], mu[0], logvar[0])

    # TODO(synk): kld_coef is not defined in the provided source; using the
    # standard annealing schedule from the reference RVAE implementation,
    # computed on the traced iteration index (no recompile per step).
    coef = (jnp.tanh((jnp.asarray(i, jnp.float32) - 3500.0) / 1000.0) + 1.0) / 2.0

    loss_ru = 850.0 * ce_ru + coef * (kld_ru + cd_kld_ru)
    loss_en = 850.0 * ce_en + coef * (kld_en + cd_kld_en)
    return ((loss_ru, ce_ru, kld_ru, cd_kld_ru),
            (loss_en, ce_en, kld_en, cd_kld_en))


if __name__ == "__main__":
    key = jax.random.PRNGKey(0)
    k_ru, k_en, k1, k2, k3, k4, k5, k6 = jax.random.split(key, 8)
    params = pack_params(init_vae_params(k_ru, VOCAB["ru"]),
                         init_vae_params(k_en, VOCAB["en"]))

    enc_ru = jax.random.randint(k1, (BATCH, SEQ), 0, VOCAB["ru"], jnp.int32)
    enc_en = jax.random.randint(k2, (BATCH, SEQ), 0, VOCAB["en"], jnp.int32)
    dec_ru = jax.random.randint(k3, (BATCH, SEQ + 1), 0, VOCAB["ru"], jnp.int32)
    dec_en = jax.random.randint(k4, (BATCH, SEQ + 1), 0, VOCAB["en"], jnp.int32)
    tgt_ru = jax.random.randint(k5, (BATCH, SEQ + 1), 0, VOCAB["ru"], jnp.int32)
    tgt_en = jax.random.randint(k6, (BATCH, SEQ + 1), 0, VOCAB["en"], jnp.int32)

    eps_key_ru, eps_key_en, dkey = jax.random.split(jax.random.PRNGKey(42), 3)
    eps_ru = jax.random.normal(eps_key_ru, (BATCH, LATENT), jnp.float32)
    eps_en = jax.random.normal(eps_key_en, (BATCH, LATENT), jnp.float32)

    out = cdvae_forward(params, 0.0, enc_ru, enc_en, dec_ru, dec_en,
                        tgt_ru, tgt_en, 100, eps_ru, eps_en, dkey)
    out = jax.block_until_ready(out)
    print("KERNEL_OK")
</pallas_src>

<mosaic_0001>
module attributes {stable_mosaic.version = 11 : i64} {
  func.func @_cdvae_kernel(%arg0: i32, %arg1: memref<1x336x128xf32, #tpu.memory_space<vmem>>, %arg2: memref<1x80x1xi32, #tpu.memory_space<vmem>>, %arg3: memref<1x64x1xf32, #tpu.memory_space<vmem>>, %arg4: memref<1x2x8xf32, #tpu.memory_space<vmem>>, %arg5: memref<1x1x2xf32, #tpu.memory_space<vmem>>, %arg6: memref<1x2x16xf32, #tpu.memory_space<vmem>>) attributes {dimension_semantics = [#tpu.dimension_semantics<parallel>], iteration_bounds = array<i64: 2>, scalar_prefetch = 0 : i64, scratch_operands = 0 : i64, tpu.core_type = #tpu.core_type<tc>, window_params = [{transform_indices = @transform_0, window_bounds = array<i64: 1, 336, 128>}, {transform_indices = @transform_1, window_bounds = array<i64: 1, 80, 1>}, {transform_indices = @transform_2, window_bounds = array<i64: 1, 64, 1>}, {transform_indices = @transform_3, window_bounds = array<i64: 1, 2, 8>}, {transform_indices = @transform_4, window_bounds = array<i64: 1, 1, 2>}, {transform_indices = @transform_5, window_bounds = array<i64: 1, 2, 16>}]} {
    %c0 = arith.constant 0 : index
    %c0_0 = arith.constant 0 : index
    %c0_1 = arith.constant 0 : index
    %0 = vector.load %arg2[%c0, %c0_0, %c0_1] : memref<1x80x1xi32, #tpu.memory_space<vmem>>, vector<1x16x1xi32>
    %1 = vector.shape_cast %0 : vector<1x16x1xi32> to vector<16x1xi32>
    %2 = tpu.iota {dimensions = array<i32: 1>} : vector<16x128xi32>
    %3 = vector.broadcast %1 : vector<16x1xi32> to vector<16x128xi32>
    %4 = arith.cmpi eq, %2, %3 : vector<16x128xi32>
    %5 = arith.extui %4 : vector<16x128xi1> to vector<16x128xi32>
    %6 = arith.sitofp %5 : vector<16x128xi32> to vector<16x128xf32>
    %7 = tpu.iota {dimensions = array<i32: 1>} : vector<2x16xi32>
    %8 = tpu.iota {dimensions = array<i32: 0>} : vector<2x16xi32>
    %c8_i32 = arith.constant 8 : i32
    %9 = vector.broadcast %c8_i32 : i32 to vector<2x16xi32>
    %10 = arith.muli %8, %9 : vector<2x16xi32>
    %11 = arith.cmpi sge, %7, %10 : vector<2x16xi32>
    %c1_i32 = arith.constant 1 : i32
    %12 = vector.broadcast %c1_i32 : i32 to vector<2x16xi32>
    %13 = arith.addi %8, %12 : vector<2x16xi32>
    %c8_i32_2 = arith.constant 8 : i32
    %14 = vector.broadcast %c8_i32_2 : i32 to vector<2x16xi32>
    %15 = arith.muli %13, %14 : vector<2x16xi32>
    %16 = arith.cmpi slt, %7, %15 : vector<2x16xi32>
    %17 = arith.andi %11, %16 : vector<2x16xi1>
    %18 = arith.extui %17 : vector<2x16xi1> to vector<2x16xi32>
    %19 = arith.sitofp %18 : vector<2x16xi32> to vector<2x16xf32>
    %cst = arith.constant 1.250000e-01 : f32
    %20 = vector.broadcast %cst : f32 to vector<2x16xf32>
    %21 = arith.mulf %19, %20 : vector<2x16xf32>
    %cst_3 = arith.constant dense<0.000000e+00> : vector<2x128xf32>
    %22 = tpu.matmul %21, %6, %cst_3 {dimension_numbers = #tpu.dot_dimension_numbers<[1], [0], [0], [1], [0, 0, 1, 1], [], []>} : vector<2x16xf32>, vector<16x128xf32>, vector<2x128xf32> -> vector<2x128xf32>
    %c0_4 = arith.constant 0 : index
    %c0_5 = arith.constant 0 : index
    %c0_6 = arith.constant 0 : index
    %23 = vector.load %arg1[%c0_4, %c0_5, %c0_6] : memref<1x336x128xf32, #tpu.memory_space<vmem>>, vector<1x128x32xf32>
    %24 = vector.shape_cast %23 : vector<1x128x32xf32> to vector<128x32xf32>
    %c0_7 = arith.constant 0 : index
    %c288 = arith.constant 288 : index
    %c0_8 = arith.constant 0 : index
    %25 = vector.load %arg1[%c0_7, %c288, %c0_8] : memref<1x336x128xf32, #tpu.memory_space<vmem>>, vector<1x1x32xf32>
    %26 = vector.shape_cast %25 : vector<1x1x32xf32> to vector<1x32xf32>
    %cst_9 = arith.constant dense<0.000000e+00> : vector<2x32xf32>
    %27 = tpu.matmul %22, %24, %cst_9 {dimension_numbers = #tpu.dot_dimension_numbers<[1], [0], [0], [1], [0, 0, 1, 1], [], []>} : vector<2x128xf32>, vector<128x32xf32>, vector<2x32xf32> -> vector<2x32xf32>
    %28 = vector.broadcast %26 : vector<1x32xf32> to vector<2x32xf32>
    %29 = arith.addf %27, %28 : vector<2x32xf32>
    %30 = math.tanh %29 : vector<2x32xf32>
    %c0_10 = arith.constant 0 : index
    %c296 = arith.constant 296 : index
    %c0_11 = arith.constant 0 : index
    %31 = vector.load %arg1[%c0_10, %c296, %c0_11] : memref<1x336x128xf32, #tpu.memory_space<vmem>>, vector<1x32x16xf32>
    %32 = vector.shape_cast %31 : vector<1x32x16xf32> to vector<32x16xf32>
    %c0_12 = arith.constant 0 : index
    %c289 = arith.constant 289 : index
    %c0_13 = arith.constant 0 : index
    %33 = vector.load %arg1[%c0_12, %c289, %c0_13] : memref<1x336x128xf32, #tpu.memory_space<vmem>>, vector<1x1x16xf32>
    %34 = vector.shape_cast %33 : vector<1x1x16xf32> to vector<1x16xf32>
    %cst_14 = arith.constant dense<0.000000e+00> : vector<2x16xf32>
    %35 = tpu.matmul %30, %32, %cst_14 {dimension_numbers = #tpu.dot_dimension_numbers<[1], [0], [0], [1], [0, 0, 1, 1], [], []>} : vector<2x32xf32>, vector<32x16xf32>, vector<2x16xf32> -> vector<2x16xf32>
    %36 = vector.broadcast %34 : vector<1x16xf32> to vector<2x16xf32>
    %37 = arith.addf %35, %36 : vector<2x16xf32>
    %38 = vector.extract_strided_slice %37 {offsets = [0, 0], sizes = [2, 8], strides = [1, 1]} : vector<2x16xf32> to vector<2x8xf32>
    %39 = vector.extract_strided_slice %37 {offsets = [0, 8], sizes = [2, 8], strides = [1, 1]} : vector<2x16xf32> to vector<2x8xf32>
    %cst_15 = arith.constant 5.000000e-01 : f32
    %40 = vector.broadcast %cst_15 : f32 to vector<2x8xf32>
    %41 = arith.mulf %40, %39 : vector<2x8xf32>
    %42 = math.exp %41 : vector<2x8xf32>
    %c0_16 = arith.constant 0 : index
    %c0_17 = arith.constant 0 : index
    %c0_18 = arith.constant 0 : index
    %43 = vector.load %arg4[%c0_16, %c0_17, %c0_18] : memref<1x2x8xf32, #tpu.memory_space<vmem>>, vector<1x2x8xf32>
    %44 = vector.shape_cast %43 : vector<1x2x8xf32> to vector<2x8xf32>
    %45 = arith.mulf %42, %44 : vector<2x8xf32>
    %46 = arith.addf %38, %45 : vector<2x8xf32>
    %c0_19 = arith.constant 0 : index
    %c16 = arith.constant 16 : index
    %c0_20 = arith.constant 0 : index
    %47 = vector.load %arg2[%c0_19, %c16, %c0_20] : memref<1x80x1xi32, #tpu.memory_space<vmem>>, vector<1x32x1xi32>
    %48 = vector.shape_cast %47 : vector<1x32x1xi32> to vector<32x1xi32>
    %c0_21 = arith.constant 0 : index
    %c48 = arith.constant 48 : index
    %c0_22 = arith.constant 0 : index
    %49 = vector.load %arg2[%c0_21, %c48, %c0_22] : memref<1x80x1xi32, #tpu.memory_space<vmem>>, vector<1x32x1xi32>
    %50 = vector.shape_cast %49 : vector<1x32x1xi32> to vector<32x1xi32>
    %c0_23 = arith.constant 0 : index
    %c0_24 = arith.constant 0 : index
    %c0_25 = arith.constant 0 : index
    %51 = vector.load %arg3[%c0_23, %c0_24, %c0_25] : memref<1x64x1xf32, #tpu.memory_space<vmem>>, vector<1x32x1xf32>
    %52 = vector.shape_cast %51 : vector<1x32x1xf32> to vector<32x1xf32>
    %c0_26 = arith.constant 0 : index
    %c32 = arith.constant 32 : index
    %c0_27 = arith.constant 0 : index
    %53 = vector.load %arg3[%c0_26, %c32, %c0_27] : memref<1x64x1xf32, #tpu.memory_space<vmem>>, vector<1x32x1xf32>
    %54 = vector.shape_cast %53 : vector<1x32x1xf32> to vector<32x1xf32>
    %55 = tpu.iota {dimensions = array<i32: 1>} : vector<32x128xi32>
    %56 = vector.broadcast %48 : vector<32x1xi32> to vector<32x128xi32>
    %57 = arith.cmpi eq, %55, %56 : vector<32x128xi32>
    %58 = arith.extui %57 : vector<32x128xi1> to vector<32x128xi32>
    %59 = arith.sitofp %58 : vector<32x128xi32> to vector<32x128xf32>
    %c0_28 = arith.constant 0 : index
    %c128 = arith.constant 128 : index
    %c0_29 = arith.constant 0 : index
    %60 = vector.load %arg1[%c0_28, %c128, %c0_29] : memref<1x336x128xf32, #tpu.memory_space<vmem>>, vector<1x128x32xf32>
    %61 = vector.shape_cast %60 : vector<1x128x32xf32> to vector<128x32xf32>
    %cst_30 = arith.constant dense<0.000000e+00> : vector<32x32xf32>
    %62 = tpu.matmul %59, %61, %cst_30 {dimension_numbers = #tpu.dot_dimension_numbers<[1], [0], [0], [1], [0, 0, 1, 1], [], []>} : vector<32x128xf32>, vector<128x32xf32>, vector<32x32xf32> -> vector<32x32xf32>
    %63 = vector.broadcast %52 : vector<32x1xf32> to vector<32x32xf32>
    %64 = arith.mulf %62, %63 : vector<32x32xf32>
    %c0_31 = arith.constant 0 : index
    %c328 = arith.constant 328 : index
    %c0_32 = arith.constant 0 : index
    %65 = vector.load %arg1[%c0_31, %c328, %c0_32] : memref<1x336x128xf32, #tpu.memory_space<vmem>>, vector<1x8x32xf32>
    %66 = vector.shape_cast %65 : vector<1x8x32xf32> to vector<8x32xf32>
    %cst_33 = arith.constant dense<0.000000e+00> : vector<2x32xf32>
    %67 = tpu.matmul %46, %66, %cst_33 {dimension_numbers = #tpu.dot_dimension_numbers<[1], [0], [0], [1], [0, 0, 1, 1], [], []>} : vector<2x8xf32>, vector<8x32xf32>, vector<2x32xf32> -> vector<2x32xf32>
    %68 = vector.extract_strided_slice %67 {offsets = [0, 0], sizes = [1, 32], strides = [1, 1]} : vector<2x32xf32> to vector<1x32xf32>
    %69 = vector.shape_cast %68 : vector<1x32xf32> to vector<1x32xf32>
    %70 = vector.broadcast %69 : vector<1x32xf32> to vector<16x32xf32>
    %71 = vector.extract_strided_slice %67 {offsets = [1, 0], sizes = [1, 32], strides = [1, 1]} : vector<2x32xf32> to vector<1x32xf32>
    %72 = vector.shape_cast %71 : vector<1x32xf32> to vector<1x32xf32>
    %73 = vector.broadcast %72 : vector<1x32xf32> to vector<16x32xf32>
    %74 = tpu.concatenate %70, %73 in 0 : vector<16x32xf32>, vector<16x32xf32> -> vector<32x32xf32>
    %c0_34 = arith.constant 0 : index
    %c290 = arith.constant 290 : index
    %c0_35 = arith.constant 0 : index
    %75 = vector.load %arg1[%c0_34, %c290, %c0_35] : memref<1x336x128xf32, #tpu.memory_space<vmem>>, vector<1x1x32xf32>
    %76 = vector.shape_cast %75 : vector<1x1x32xf32> to vector<1x32xf32>
    %77 = arith.addf %64, %74 : vector<32x32xf32>
    %78 = vector.broadcast %76 : vector<1x32xf32> to vector<32x32xf32>
    %79 = arith.addf %77, %78 : vector<32x32xf32>
    %80 = math.tanh %79 : vector<32x32xf32>
    %c0_36 = arith.constant 0 : index
    %c256 = arith.constant 256 : index
    %c0_37 = arith.constant 0 : index
    %81 = vector.load %arg1[%c0_36, %c256, %c0_37] : memref<1x336x128xf32, #tpu.memory_space<vmem>>, vector<1x32x128xf32>
    %82 = vector.shape_cast %81 : vector<1x32x128xf32> to vector<32x128xf32>
    %c0_38 = arith.constant 0 : index
    %c291 = arith.constant 291 : index
    %c0_39 = arith.constant 0 : index
    %83 = vector.load %arg1[%c0_38, %c291, %c0_39] : memref<1x336x128xf32, #tpu.memory_space<vmem>>, vector<1x1x128xf32>
    %84 = vector.shape_cast %83 : vector<1x1x128xf32> to vector<1x128xf32>
    %cst_40 = arith.constant dense<0.000000e+00> : vector<32x128xf32>
    %85 = tpu.matmul %80, %82, %cst_40 {dimension_numbers = #tpu.dot_dimension_numbers<[1], [0], [0], [1], [0, 0, 1, 1], [], []>} : vector<32x32xf32>, vector<32x128xf32>, vector<32x128xf32> -> vector<32x128xf32>
    %86 = vector.broadcast %84 : vector<1x128xf32> to vector<32x128xf32>
    %87 = arith.addf %85, %86 : vector<32x128xf32>
    %cst_41 = arith.constant dense<0xFF800000> : vector<32xf32>
    %88 = vector.multi_reduction <maximumf>, %87, %cst_41 [1] : vector<32x128xf32> to vector<32xf32>
    %89 = vector.shape_cast %88 : vector<32xf32> to vector<32x1xf32>
    %90 = vector.broadcast %89 : vector<32x1xf32> to vector<32x128xf32>
    %91 = arith.subf %87, %90 : vector<32x128xf32>
    %92 = math.exp %91 : vector<32x128xf32>
    %cst_42 = arith.constant dense<0.000000e+00> : vector<32xf32>
    %93 = vector.multi_reduction <add>, %92, %cst_42 [1] : vector<32x128xf32> to vector<32xf32>
    %94 = vector.shape_cast %93 : vector<32xf32> to vector<32x1xf32>
    %95 = math.log %94 : vector<32x1xf32>
    %96 = arith.addf %95, %89 : vector<32x1xf32>
    %97 = vector.broadcast %50 : vector<32x1xi32> to vector<32x128xi32>
    %98 = arith.cmpi eq, %55, %97 : vector<32x128xi32>
    %cst_43 = arith.constant 0.000000e+00 : f32
    %99 = vector.broadcast %cst_43 : f32 to vector<32x128xf32>
    %100 = arith.select %98, %87, %99 : vector<32x128xi1>, vector<32x128xf32>
    %cst_44 = arith.constant dense<0.000000e+00> : vector<32xf32>
    %101 = vector.multi_reduction <add>, %100, %cst_44 [1] : vector<32x128xf32> to vector<32xf32>
    %102 = vector.shape_cast %101 : vector<32xf32> to vector<32x1xf32>
    %103 = arith.subf %96, %102 : vector<32x1xf32>
    %104 = arith.mulf %54, %103 : vector<32x1xf32>
    %cst_45 = arith.constant dense<0.000000e+00> : vector<1xf32>
    %105 = vector.multi_reduction <add>, %104, %cst_45 [0] : vector<32x1xf32> to vector<1xf32>
    %106 = vector.shape_cast %105 : vector<1xf32> to vector<1x1xf32>
    %cst_46 = arith.constant 0.055555556 : f32
    %107 = vector.broadcast %cst_46 : f32 to vector<1x1xf32>
    %108 = arith.mulf %106, %107 : vector<1x1xf32>
    %109 = arith.mulf %38, %38 : vector<2x8xf32>
    %110 = arith.subf %39, %109 : vector<2x8xf32>
    %111 = math.exp %39 : vector<2x8xf32>
    %112 = arith.subf %110, %111 : vector<2x8xf32>
    %cst_47 = arith.constant 1.000000e+00 : f32
    %113 = vector.broadcast %cst_47 : f32 to vector<2x8xf32>
    %114 = arith.addf %112, %113 : vector<2x8xf32>
    %cst_48 = arith.constant dense<0.000000e+00> : vector<2xf32>
    %115 = vector.multi_reduction <add>, %114, %cst_48 [1] : vector<2x8xf32> to vector<2xf32>
    %116 = vector.shape_cast %115 : vector<2xf32> to vector<2x1xf32>
    %cst_49 = arith.constant -5.000000e-01 : f32
    %117 = vector.broadcast %cst_49 : f32 to vector<2x1xf32>
    %118 = arith.mulf %117, %116 : vector<2x1xf32>
    %cst_50 = arith.constant dense<0.000000e+00> : vector<1xf32>
    %119 = vector.multi_reduction <add>, %118, %cst_50 [0] : vector<2x1xf32> to vector<1xf32>
    %120 = vector.shape_cast %119 : vector<1xf32> to vector<1x1xf32>
    %cst_51 = arith.constant 5.000000e-01 : f32
    %121 = vector.broadcast %cst_51 : f32 to vector<1x1xf32>
    %122 = arith.mulf %120, %121 : vector<1x1xf32>
    %123 = tpu.concatenate %108, %122 in 1 : vector<1x1xf32>, vector<1x1xf32> -> vector<1x2xf32>
    %c0_52 = arith.constant 0 : index
    %c0_53 = arith.constant 0 : index
    %c0_54 = arith.constant 0 : index
    %124 = vector.load %arg5[%c0_52, %c0_53, %c0_54] : memref<1x1x2xf32, #tpu.memory_space<vmem>>, vector<1x1x2xf32>
    %125 = vector.shape_cast %124 : vector<1x1x2xf32> to vector<1x2xf32>
    %126 = vector.shape_cast %123 : vector<1x2xf32> to vector<1x1x2xf32>
    tpu.vector_store %arg5[%c0_52, %c0_53, %c0_54], %126 {strides = array<i32>} : memref<1x1x2xf32, #tpu.memory_space<vmem>>, vector<1x1x2xf32>,
    %c0_55 = arith.constant 0 : index
    %c0_56 = arith.constant 0 : index
    %c0_57 = arith.constant 0 : index
    %127 = vector.load %arg6[%c0_55, %c0_56, %c0_57] : memref<1x2x16xf32, #tpu.memory_space<vmem>>, vector<1x2x16xf32>
    %128 = vector.shape_cast %127 : vector<1x2x16xf32> to vector<2x16xf32>
    %129 = vector.shape_cast %37 : vector<2x16xf32> to vector<1x2x16xf32>
    tpu.vector_store %arg6[%c0_55, %c0_56, %c0_57], %129 {strides = array<i32>} : memref<1x2x16xf32, #tpu.memory_space<vmem>>, vector<1x2x16xf32>,
    return
  }
  func.func @transform_0(%arg0: i32) -> (i32, i32, i32) {
    %c0_i32 = arith.constant 0 : i32
    %c0_i32_0 = arith.constant 0 : i32
    %c0_i32_1 = arith.constant 0 : i32
    return %arg0, %c0_i32, %c0_i32_0 : i32, i32, i32
  }
  func.func @transform_1(%arg0: i32) -> (i32, i32, i32) {
    %c0_i32 = arith.constant 0 : i32
    %c0_i32_0 = arith.constant 0 : i32
    %c0_i32_1 = arith.constant 0 : i32
    return %arg0, %c0_i32, %c0_i32_0 : i32, i32, i32
  }
  func.func @transform_2(%arg0: i32) -> (i32, i32, i32) {
    %c0_i32 = arith.constant 0 : i32
    %c0_i32_0 = arith.constant 0 : i32
    %c0_i32_1 = arith.constant 0 : i32
    return %arg0, %c0_i32, %c0_i32_0 : i32, i32, i32
  }
  func.func @transform_3(%arg0: i32) -> (i32, i32, i32) {
    %c0_i32 = arith.constant 0 : i32
    %c0_i32_0 = arith.constant 0 : i32
    %c0_i32_1 = arith.constant 0 : i32
    return %arg0, %c0_i32, %c0_i32_0 : i32, i32, i32
  }
  func.func @transform_4(%arg0: i32) -> (i32, i32, i32) {
    %c0_i32 = arith.constant 0 : i32
    %c0_i32_0 = arith.constant 0 : i32
    %c0_i32_1 = arith.constant 0 : i32
    return %arg0, %c0_i32, %c0_i32_0 : i32, i32, i32
  }
  func.func @transform_5(%arg0: i32) -> (i32, i32, i32) {
    %c0_i32 = arith.constant 0 : i32
    %c0_i32_0 = arith.constant 0 : i32
    %c0_i32_1 = arith.constant 0 : i32
    return %arg0, %c0_i32, %c0_i32_0 : i32, i32, i32
  }
}

</mosaic_0001>

<llo_original>
// kernel: cdvae_forward.1
$region0: #{cdvae_forward.1}
  #allocation0 [shape = 'u32[]', space=smem, size = 0x4, offset = 0x4, fixed_abs, tag = 'smem constant byte address 0x4 - core index']
  #allocation1 [shape = 'u32[144,128]{1,0:T(1,128)}', space=vmem, size = 0x12000, scoped, tag = 'internal scratch']
  %s0 = inlined_call_operand.hbm [shape: f32[2,336,128], index: 0, kind: input, shape index: {}]
  %s1 = inlined_call_operand.vmem [shape: s32[2,80,1], index: 1, kind: input, shape index: {}]
  %s2 = inlined_call_operand.vmem [shape: f32[2,64,1], index: 2, kind: input, shape index: {}]
  %s3 = inlined_call_operand.vmem [shape: f32[2,2,8], index: 3, kind: input, shape index: {}]
  %s4 = inlined_call_operand.vmem [shape: f32[2,1,2], index: 4, kind: output, shape index: {0}]
  %s5 = inlined_call_operand.vmem [shape: f32[2,2,16], index: 5, kind: output, shape index: {1}]
  %6 = xla_tuple %s4, %s5
  %s7 = sld [smem:[#allocation0]]
  $region61: #{cdvae_forward.1} parent=0
    _
  %s9 = ssub.s32 1, %s7
  %s10 = scalar_select 0, %s9, %s7
  $region1: #{cdvae_forward.1} parent=0
    #allocation2 [shape = 'u8[344064]{0}', space=vmem, size = 0x54000, scoped, tag = 'input window, operand 0']
    #allocation3 [shape = 's32[2]{0}', space=sflag, size = 0x8, scoped, tag = 'scoped memory for cdvae_forward.1']
    %11 = vsyncpa [#allocation3], 0
    %s12 = scalar_lea.sflag [#allocation3], 1
    %13 = vsyncpa %s12, 0
    loop: start=0, step=1, limit=4
    $region2: #{cdvae_forward.1} parent=1 // loop_pre_header
      _
    $region3: #{cdvae_forward.1} parent=1 // loop_header
      %s15 = sphi 0, %s19
      %p16 = scmp.ge.s32.totalorder %s15, 4
      %s25 = sphi 0, %s27
      %s28 = sphi 0, %s25
      %s29 = sphi 0, %s28
      %s45 = sphi 0, %s29
      %s51 = sphi 0, %s53
      %s54 = sphi 0, %s51
      %s55 = sphi 0, %s54
      %s71 = sphi 0, %s55
      %s77 = sphi 0, %s79
      %s80 = sphi 0, %s77
      %s81 = sphi 0, %s80
      %s97 = sphi 0, %s81
      %s103 = sphi 0, %s105
      %s106 = sphi 0, %s103
      %s107 = sphi 0, %s106
      %s123 = sphi 0, %s107
      %s129 = sphi 0, %s131
      %s132 = sphi 0, %s129
      %s133 = sphi 0, %s132
      %s149 = sphi 0, %s133
      %s155 = sphi 0, %s157
      %s158 = sphi 0, %s155
      %s159 = sphi 0, %s158
      %s175 = sphi 0, %s159
    $region4: #{cdvae_forward.1} parent=1 // loop_header_branch
      %18 = sbr.rel (%p16) target = $region8
    $region5: #{cdvae_forward.1} parent=1 // loop_body
      %s20 = ssub.s32 %s15, 1
      %s21 = ssub.s32 %s15, 2
      %s22 = sadd.s32 %s15, 1
      %s23 = ssub.s32 %s15, %s22
      %p24 = scmp.eq.s32.totalorder %s23, 0
      %s26 = sadd.s32 %s25, 1
      %s27 = scalar_select %p24, %s25, %s26
      %p30 = pneg %p24
      %p31 = scmp.eq.s32.totalorder %s15, 1
      %p32 = por %p30, %p31
      %p33 = scmp.ne.s32.totalorder %s25, %s28
      %p34 = scmp.eq.s32.totalorder %s15, 0
      %p35 = por %p33, %p34
      %p36 = scmp.ne.s32.totalorder %s25, %s28
      %p37 = scmp.eq.s32.totalorder %s20, 1
      %p38 = por %p36, %p37
      %p39 = scmp.ne.s32.totalorder %s28, %s29
      %p40 = scmp.eq.s32.totalorder %s20, 0
      %p41 = por %p39, %p40
      %p42 = scmp.ne.s32.totalorder %s28, %s29
      %p43 = scmp.eq.s32.totalorder %s21, 1
      %p44 = por %p42, %p43
      %p46 = scmp.ne.s32.totalorder %s29, %s45
      %p47 = scmp.eq.s32.totalorder %s21, 0
      %p48 = por %p46, %p47
      %s49 = ssub.s32 %s15, %s22
      %p50 = scmp.eq.s32.totalorder %s49, 0
      %s52 = sadd.s32 %s51, 1
      %s53 = scalar_select %p50, %s51, %s52
      %p56 = pneg %p50
      %p57 = scmp.eq.s32.totalorder %s15, 1
      %p58 = por %p56, %p57
      %p59 = scmp.ne.s32.totalorder %s51, %s54
      %p60 = scmp.eq.s32.totalorder %s15, 0
      %p61 = por %p59, %p60
      %p62 = scmp.ne.s32.totalorder %s51, %s54
      %p63 = scmp.eq.s32.totalorder %s20, 1
      %p64 = por %p62, %p63
      %p65 = scmp.ne.s32.totalorder %s54, %s55
      %p66 = scmp.eq.s32.totalorder %s20, 0
      %p67 = por %p65, %p66
      %p68 = scmp.ne.s32.totalorder %s54, %s55
      %p69 = scmp.eq.s32.totalorder %s21, 1
      %p70 = por %p68, %p69
      %p72 = scmp.ne.s32.totalorder %s55, %s71
      %p73 = scmp.eq.s32.totalorder %s21, 0
      %p74 = por %p72, %p73
      %s75 = ssub.s32 %s15, %s22
      %p76 = scmp.eq.s32.totalorder %s75, 0
      %s78 = sadd.s32 %s77, 1
      %s79 = scalar_select %p76, %s77, %s78
      %p82 = pneg %p76
      %p83 = scmp.eq.s32.totalorder %s15, 1
      %p84 = por %p82, %p83
      %p85 = scmp.ne.s32.totalorder %s77, %s80
      %p86 = scmp.eq.s32.totalorder %s15, 0
      %p87 = por %p85, %p86
      %p88 = scmp.ne.s32.totalorder %s77, %s80
      %p89 = scmp.eq.s32.totalorder %s20, 1
      %p90 = por %p88, %p89
      %p91 = scmp.ne.s32.totalorder %s80, %s81
      %p92 = scmp.eq.s32.totalorder %s20, 0
      %p93 = por %p91, %p92
      %p94 = scmp.ne.s32.totalorder %s80, %s81
      %p95 = scmp.eq.s32.totalorder %s21, 1
      %p96 = por %p94, %p95
      %p98 = scmp.ne.s32.totalorder %s81, %s97
      %p99 = scmp.eq.s32.totalorder %s21, 0
      %p100 = por %p98, %p99
      %s101 = ssub.s32 %s15, %s22
      %p102 = scmp.eq.s32.totalorder %s101, 0
      %s104 = sadd.s32 %s103, 1
      %s105 = scalar_select %p102, %s103, %s104
      %p108 = pneg %p102
      %p109 = scmp.eq.s32.totalorder %s15, 1
      %p110 = por %p108, %p109
      %p111 = scmp.ne.s32.totalorder %s103, %s106
      %p112 = scmp.eq.s32.totalorder %s15, 0
      %p113 = por %p111, %p112
      %p114 = scmp.ne.s32.totalorder %s103, %s106
      %p115 = scmp.eq.s32.totalorder %s20, 1
      %p116 = por %p114, %p115
      %p117 = scmp.ne.s32.totalorder %s106, %s107
      %p118 = scmp.eq.s32.totalorder %s20, 0
      %p119 = por %p117, %p118
      %p120 = scmp.ne.s32.totalorder %s106, %s107
      %p121 = scmp.eq.s32.totalorder %s21, 1
      %p122 = por %p120, %p121
      %p124 = scmp.ne.s32.totalorder %s107, %s123
      %p125 = scmp.eq.s32.totalorder %s21, 0
      %p126 = por %p124, %p125
      %s127 = ssub.s32 %s15, %s22
      %p128 = scmp.eq.s32.totalorder %s127, 0
      %s130 = sadd.s32 %s129, 1
      %s131 = scalar_select %p128, %s129, %s130
      %p134 = pneg %p128
      %p135 = scmp.eq.s32.totalorder %s15, 1
      %p136 = por %p134, %p135
      %p137 = scmp.ne.s32.totalorder %s129, %s132
      %p138 = scmp.eq.s32.totalorder %s15, 0
      %p139 = por %p137, %p138
      %p140 = scmp.ne.s32.totalorder %s129, %s132
      %p141 = scmp.eq.s32.totalorder %s20, 1
      %p142 = por %p140, %p141
      %p143 = scmp.ne.s32.totalorder %s132, %s133
      %p144 = scmp.eq.s32.totalorder %s20, 0
      %p145 = por %p143, %p144
      %p146 = scmp.ne.s32.totalorder %s132, %s133
      %p147 = scmp.eq.s32.totalorder %s21, 1
      %p148 = por %p146, %p147
      %p150 = scmp.ne.s32.totalorder %s133, %s149
      %p151 = scmp.eq.s32.totalorder %s21, 0
      %p152 = por %p150, %p151
      %s153 = ssub.s32 %s15, %s22
      %p154 = scmp.eq.s32.totalorder %s153, 0
      %s156 = sadd.s32 %s155, 1
      %s157 = scalar_select %p154, %s155, %s156
      %p160 = pneg %p154
      %p161 = scmp.eq.s32.totalorder %s15, 1
      %p162 = por %p160, %p161
      %p163 = scmp.ne.s32.totalorder %s155, %s158
      %p164 = scmp.eq.s32.totalorder %s15, 0
      %p165 = por %p163, %p164
      %p166 = scmp.ne.s32.totalorder %s155, %s158
      %p167 = scmp.eq.s32.totalorder %s20, 1
      %p168 = por %p166, %p167
      %p169 = scmp.ne.s32.totalorder %s158, %s159
      %p170 = scmp.eq.s32.totalorder %s20, 0
      %p171 = por %p169, %p170
      %p172 = scmp.ne.s32.totalorder %s158, %s159
      %p173 = scmp.eq.s32.totalorder %s21, 1
      %p174 = por %p172, %p173
      %p176 = scmp.ne.s32.totalorder %s159, %s175
      %p177 = scmp.eq.s32.totalorder %s21, 0
      %p178 = por %p176, %p177
      %p179 = scmp.le.s32.totalorder 1, %s15
      %p180 = scmp.lt.s32.totalorder %s15, 3
      %p181 = pnand %p179, %p180
      %p182 = pneg %p181
      // Predicated region
      $region9: #{cdvae_forward.1} parent=5 // pred_check
        _
      $region10: #{cdvae_forward.1} parent=5 // pred_check_branch
        %184 = sbr.rel (%p181) target = $region12
      $region11: #{cdvae_forward.1} parent=5 // pred_region
        %s185 = ssub.s32 %s15, 1
      $region12: #{cdvae_forward.1} parent=5 // pred_fallthru
        _
      %p186 = scmp.lt.s32.totalorder %s15, 2
      // Predicated region
      $region13: #{cdvae_forward.1} parent=5 // pred_check
        %p187 = pneg %p186
      $region14: #{cdvae_forward.1} parent=5 // pred_check_branch
        %189 = sbr.rel (%p187) target = $region16
      $region15: #{cdvae_forward.1} parent=5 // pred_region
        // Predicated region
        $region17: #{cdvae_forward.1} parent=15 // pred_check
          %p190 = pneg %p35
        $region18: #{cdvae_forward.1} parent=15 // pred_check_branch
          %192 = sbr.rel (%p190) target = $region20
        $region19: #{cdvae_forward.1} parent=15 // pred_region
          %s193 = sand.u32 %s25, 1
          %s194 = scalar_lea.sflag [#allocation3], %s193
          %s195 = sand.u32 %s25, 1
          %s196 = smul.addr %s195, 336
          %s197 = scalar_lea.vmem [#allocation2], %s196
          %s199 = ssub.s32 5376, 5376
          %200 = vsyncadd %s194, %s199
          %s201 = smul.addr %s15, 42
          %s202 = smul.addr %s201, 128
          %s203 = scalar_lea.hbm %s0, %s202
          %s204 = sshll.u32 %s197, 4
          %s205 = int_to_ptr.vmem [resolvable:$true] %s204
          %210 = dma.hbm_to_vmem [thread:$0]  %s203, 5376, %s205, %s194, 128, 128, 8
        $region20: #{cdvae_forward.1} parent=15 // pred_fallthru
          _
        // Predicated region
        $region21: #{cdvae_forward.1} parent=15 // pred_check
          %p211 = pneg %p61
        $region22: #{cdvae_forward.1} parent=15 // pred_check_branch
          %213 = sbr.rel (%p211) target = $region24
        $region23: #{cdvae_forward.1} parent=15 // pred_region
          %p214 = scmp.lt.s32.totalorder %s15, 1
          %s215 = scalar_select %p214, %s15, 1
          %s216 = smul.addr %s215, 10
          %s217 = smul.addr %s216, 8
          %s218 = scalar_lea.vmem %s1, %s217
        $region24: #{cdvae_forward.1} parent=15 // pred_fallthru
          _
        // Predicated region
        $region25: #{cdvae_forward.1} parent=15 // pred_check
          %p219 = pneg %p87
        $region26: #{cdvae_forward.1} parent=15 // pred_check_branch
          %221 = sbr.rel (%p219) target = $region28
        $region27: #{cdvae_forward.1} parent=15 // pred_region
          %p222 = scmp.lt.s32.totalorder %s15, 1
          %s223 = scalar_select %p222, %s15, 1
          %s224 = smul.addr %s223, 8
          %s225 = smul.addr %s224, 8
          %s226 = scalar_lea.vmem %s2, %s225
        $region28: #{cdvae_forward.1} parent=15 // pred_fallthru
          _
        // Predicated region
        $region29: #{cdvae_forward.1} parent=15 // pred_check
          %p227 = pneg %p113
        $region30: #{cdvae_forward.1} parent=15 // pred_check_branch
          %229 = sbr.rel (%p227) target = $region32
        $region31: #{cdvae_forward.1} parent=15 // pred_region
          %p230 = scmp.lt.s32.totalorder %s15, 1
          %s231 = scalar_select %p230, %s15, 1
          %s232 = smul.addr %s231, 2
          %s233 = scalar_lea.vmem %s3, %s232
        $region32: #{cdvae_forward.1} parent=15 // pred_fallthru
          _
      $region16: #{cdvae_forward.1} parent=5 // pred_fallthru
        _
      %p234 = scmp.le.s32.totalorder 1, %s15
      %p235 = scmp.lt.s32.totalorder %s15, 3
      %p236 = pnand %p234, %p235
      %p237 = pneg %p236
      // Predicated region
      $region33: #{cdvae_forward.1} parent=5 // pred_check
        _
      $region34: #{cdvae_forward.1} parent=5 // pred_check_branch
        %239 = sbr.rel (%p236) target = $region36
      $region35: #{cdvae_forward.1} parent=5 // pred_region
        %s240 = ssub.s32 %s15, 1
        %s241 = sand.u32 %s28, 1
        %s242 = scalar_lea.sflag [#allocation3], %s241
        %s243 = sand.u32 %s28, 1
        %s244 = smul.addr %s243, 336
        %s245 = scalar_lea.vmem [#allocation2], %s244
        // Predicated region
        $region37: #{cdvae_forward.1} parent=35 // pred_check
          %p246 = pneg %p41
        $region38: #{cdvae_forward.1} parent=35 // pred_check_branch
          %248 = sbr.rel (%p246) target = $region40
        $region39: #{cdvae_forward.1} parent=35 // pred_region
          %249 = dma.done %s242, 5376
        $region40: #{cdvae_forward.1} parent=35 // pred_fallthru
          _
        %s250 = sand.u32 %s28, 1
        %s251 = scalar_lea.sflag [#allocation3], %s250
        %s252 = sand.u32 %s28, 1
        %s253 = smul.addr %s252, 336
        %s254 = scalar_lea.vmem [#allocation2], %s253
        %p255 = pneg %p41
        %p256 = pneg %p38
        %p257 = scmp.lt.s32.totalorder %s20, 1
        %s258 = scalar_select %p257, %s20, 1
        %s259 = smul.addr %s258, 10
        %s260 = smul.addr %s259, 8
        %s261 = scalar_lea.vmem %s1, %s260
        %p262 = pneg %p67
        %p263 = pneg %p64
        %p264 = scmp.lt.s32.totalorder %s20, 1
        %s265 = scalar_select %p264, %s20, 1
        %s266 = smul.addr %s265, 8
        %s267 = smul.addr %s266, 8
        %s268 = scalar_lea.vmem %s2, %s267
        %p269 = pneg %p93
        %p270 = pneg %p90
        %p271 = scmp.lt.s32.totalorder %s20, 1
        %s272 = scalar_select %p271, %s20, 1
        %s273 = smul.addr %s272, 2
        %s274 = scalar_lea.vmem %s3, %s273
        %p275 = pneg %p119
        %p276 = pneg %p116
        %p277 = pneg %p145
        %p278 = pneg %p142
        %p279 = scmp.lt.s32.totalorder %s20, 1
        %s280 = scalar_select %p279, %s20, 1
        %s281 = scalar_lea.vmem %s4, %s280
        %p282 = pneg %p171
        %p283 = pneg %p168
        %p284 = scmp.lt.s32.totalorder %s20, 1
        %s285 = scalar_select %p284, %s20, 1
        %s286 = smul.addr %s285, 2
        %s287 = scalar_lea.vmem %s5, %s286
        %p288 = scmp.lt.s32.totalorder %s20, 1
        %s289 = scalar_select %p288, %s20, 1
        %s290 = smul.addr %s289, 10
        %s291 = smul.addr %s290, 8
        %s292 = scalar_lea.vmem %s1, %s291
        %p293 = scmp.lt.s32.totalorder %s20, 1
        %s294 = scalar_select %p293, %s20, 1
        %s295 = smul.addr %s294, 8
        %s296 = smul.addr %s295, 8
        %s297 = scalar_lea.vmem %s2, %s296
        %p298 = scmp.lt.s32.totalorder %s20, 1
        %s299 = scalar_select %p298, %s20, 1
        %s300 = smul.addr %s299, 2
        %s301 = scalar_lea.vmem %s3, %s300
        %p302 = scmp.lt.s32.totalorder %s20, 1
        %s303 = scalar_select %p302, %s20, 1
        %s304 = scalar_lea.vmem %s4, %s303
        %p305 = scmp.lt.s32.totalorder %s20, 1
        %s306 = scalar_select %p305, %s20, 1
        %s307 = smul.addr %s306, 2
        %s308 = scalar_lea.vmem %s5, %s307
        %v309 = vld [vmem:[%s292] sm:$0xff]
        %v310 = vld [vmem:[%s292 + $0x8] sm:$0xff]
        %v311 = vlaneseq
        %v312 = vand.u32 %v311, 127
        %313 = vset.pattern.permute.xlu0 0
        %314 = vperm.xlu0 %313, %v309
        %v315 = vpop.permute.xlu0 %314
        %316 = vset.pattern.permute.xlu0 0
        %317 = vperm.xlu0 %316, %v310
        %v318 = vpop.permute.xlu0 %317
        %vm319 = vcmp.eq.s32.totalorder %v312, %v315
        %vm320 = vcmp.eq.s32.totalorder %v312, %v318
        %v321 = vsel %vm319, 1, 0
        %v322 = vsel %vm320, 1, 0
        %v323 = vcvt.s32.f32 %v321
        %v324 = vcvt.s32.f32 %v322
        %v325 = vlaneseq
        %v326 = vshrl.u32 %v325, 7
        %v327 = vmul.u32 %v326, 8
        %vm328 = vcmp.ge.s32.totalorder %v312, %v327
        %v329 = vadd.s32 %v326, 1
        %v330 = vmul.u32 %v329, 8
        %vm331 = vcmp.lt.s32.totalorder %v312, %v330
        %vm332 = vmand %vm328, %vm331
        %v333 = vsel %vm332, 1, 0
        %v334 = vcvt.s32.f32 %v333
        %v335 = vmul.f32 %v334, 0.125
        %vm336 = vcmask 130048
        %v338 = vsel %vm336, %v335, 0
        %340 = vmatprep.subr.mxu0 0.0
        %341 = vmatpush1.msra.mxu0 %v323
        %342 = vmatprep.subr.mxu0 0.0
        %343 = vmatpush1.msra.mxu0 %v324
        %344 = vmatprep.subr.mxu0 0.0
        %345 = vmatpush1.msra.mxu0 0.0
        %346 = vmatprep.subr.mxu0 0.0
        %347 = vmatpush1.msra.mxu0 0.0
        %348 = vmatprep.subr.mxu0 0.0
        %349 = vmatpush1.msra.mxu0 0.0
        %350 = vmatprep.subr.mxu0 0.0
        %351 = vmatpush1.msra.mxu0 0.0
        %352 = vmatprep.subr.mxu0 0.0
        %353 = vmatpush1.msra.mxu0 0.0
        %354 = vmatprep.subr.mxu0 0.0
        %355 = vmatpush1.msra.mxu0 0.0
        %356 = vmatprep.subr.mxu0 0.0
        %357 = vmatpush1.msra.mxu0 0.0
        %358 = vmatprep.subr.mxu0 0.0
        %359 = vmatpush1.msra.mxu0 0.0
        %360 = vmatprep.subr.mxu0 0.0
        %361 = vmatpush1.msra.mxu0 0.0
        %362 = vmatprep.subr.mxu0 0.0
        %363 = vmatpush1.msra.mxu0 0.0
        %364 = vmatprep.subr.mxu0 0.0
        %365 = vmatpush1.msra.mxu0 0.0
        %366 = vmatprep.subr.mxu0 0.0
        %367 = vmatpush1.msra.mxu0 0.0
        %368 = vmatprep.subr.mxu0 0.0
        %369 = vmatpush1.msra.mxu0 0.0
        %370 = vmatprep.subr.mxu0 0.0
        %371 = vmatpush1.msra.mxu0 0.0
        %372 = vmatprep.subr.mxu0 0.0
        %373 = vmatpush1.msra.mxu0 0.0
        %374 = vmatprep.subr.mxu0 0.0
        %375 = vmatpush1.msra.mxu0 0.0
        %376 = vmatprep.subr.mxu0 0.0
        %377 = vmatpush1.msra.mxu0 0.0
        %378 = vmatprep.subr.mxu0 0.0
        %379 = vmatpush1.msra.mxu0 0.0
        %380 = vmatprep.subr.mxu0 0.0
        %381 = vmatpush1.msra.mxu0 0.0
        %382 = vmatprep.subr.mxu0 0.0
        %383 = vmatpush1.msra.mxu0 0.0
        %384 = vmatprep.subr.mxu0 0.0
        %385 = vmatpush1.msra.mxu0 0.0
        %386 = vmatprep.subr.mxu0 0.0
        %387 = vmatpush1.msra.mxu0 0.0
        %388 = vmatprep.subr.mxu0 0.0
        %389 = vmatpush1.msra.mxu0 0.0
        %390 = vmatprep.subr.mxu0 0.0
        %391 = vmatpush1.msra.mxu0 0.0
        %392 = vmatprep.subr.mxu0 0.0
        %393 = vmatpush1.msra.mxu0 0.0
        %394 = vmatprep.subr.mxu0 0.0
        %395 = vmatpush1.msra.mxu0 0.0
        %396 = vmatprep.subr.mxu0 0.0
        %397 = vmatpush1.msra.mxu0 0.0
        %398 = vmatprep.subr.mxu0 0.0
        %399 = vmatpush1.msra.mxu0 0.0
        %400 = vmatprep.subr.mxu0 0.0
        %401 = vmatpush1.msra.mxu0 0.0
        %402 = vmatprep.subr.mxu0 0.0
        %403 = vmatpush1.msra.mxu0 0.0
        %404 = vmatprep.mubr.f32.mxu0 0.0
        %405 = vmatmul.mubr.f32.gmra.mrb[0].mxu0 %v338
        %v406 = vpop.f32.mrb[0].mxu0
        %v407 = vadd.f32 0.0, %v406
        %v408 = vpop.f32.mrb[0].mxu0
        %409 = vdwg.mxu0
        %v410 = vld [vmem:[%s245] sm:$0xff]
        %v411 = vld [vmem:[%s245 + $0x8] sm:$0xff]
        %v412 = vld [vmem:[%s245 + $0x10] sm:$0xff]
        %v413 = vld [vmem:[%s245 + $0x18] sm:$0xff]
        %v414 = vld [vmem:[%s245 + $0x20] sm:$0xff]
        %v415 = vld [vmem:[%s245 + $0x28] sm:$0xff]
        %v416 = vld [vmem:[%s245 + $0x30] sm:$0xff]
        %v417 = vld [vmem:[%s245 + $0x38] sm:$0xff]
        %v418 = vld [vmem:[%s245 + $0x40] sm:$0xff]
        %v419 = vld [vmem:[%s245 + $0x48] sm:$0xff]
        %v420 = vld [vmem:[%s245 + $0x50] sm:$0xff]
        %v421 = vld [vmem:[%s245 + $0x58] sm:$0xff]
        %v422 = vld [vmem:[%s245 + $0x60] sm:$0xff]
        %v423 = vld [vmem:[%s245 + $0x68] sm:$0xff]
        %v424 = vld [vmem:[%s245 + $0x70] sm:$0xff]
        %v425 = vld [vmem:[%s245 + $0x78] sm:$0xff]
        %v426 = vld [vmem:[%s245 + $0x120] sm:$0x1]
        %v427 = vlaneseq
        %v428 = vshrl.u32 %v427, 7
        %v429 = vsub.s32 0, %v428
        %v430 = vrot.slane %v426, %v429
        %431 = vmatprep.subr.mxu0 0.0
        %432 = vmatpush1.msra.mxu0 %v410
        %433 = vmatprep.subr.mxu0 0.0
        %434 = vmatpush1.msra.mxu0 %v411
        %435 = vmatprep.subr.mxu0 0.0
        %436 = vmatpush1.msra.mxu0 %v412
        %437 = vmatprep.subr.mxu0 0.0
        %438 = vmatpush1.msra.mxu0 %v413
        %439 = vmatprep.subr.mxu0 0.0
        %440 = vmatpush1.msra.mxu0 %v414
        %441 = vmatprep.subr.mxu0 0.0
        %442 = vmatpush1.msra.mxu0 %v415
        %443 = vmatprep.subr.mxu0 0.0
        %444 = vmatpush1.msra.mxu0 %v416
        %445 = vmatprep.subr.mxu0 0.0
        %446 = vmatpush1.msra.mxu0 %v417
        %447 = vmatprep.subr.mxu0 0.0
        %448 = vmatpush1.msra.mxu0 %v418
        %449 = vmatprep.subr.mxu0 0.0
        %450 = vmatpush1.msra.mxu0 %v419
        %451 = vmatprep.subr.mxu0 0.0
        %452 = vmatpush1.msra.mxu0 %v420
        %453 = vmatprep.subr.mxu0 0.0
        %454 = vmatpush1.msra.mxu0 %v421
        %455 = vmatprep.subr.mxu0 0.0
        %456 = vmatpush1.msra.mxu0 %v422
        %457 = vmatprep.subr.mxu0 0.0
        %458 = vmatpush1.msra.mxu0 %v423
        %459 = vmatprep.subr.mxu0 0.0
        %460 = vmatpush1.msra.mxu0 %v424
        %461 = vmatprep.subr.mxu0 0.0
        %462 = vmatpush1.msra.mxu0 %v425
        %463 = vmatprep.subr.mxu0 0.0
        %464 = vmatpush1.msra.mxu0 0.0
        %465 = vmatprep.subr.mxu0 0.0
        %466 = vmatpush1.msra.mxu0 0.0
        %467 = vmatprep.subr.mxu0 0.0
        %468 = vmatpush1.msra.mxu0 0.0
        %469 = vmatprep.subr.mxu0 0.0
        %470 = vmatpush1.msra.mxu0 0.0
        %471 = vmatprep.subr.mxu0 0.0
        %472 = vmatpush1.msra.mxu0 0.0
        %473 = vmatprep.subr.mxu0 0.0
        %474 = vmatpush1.msra.mxu0 0.0
        %475 = vmatprep.subr.mxu0 0.0
        %476 = vmatpush1.msra.mxu0 0.0
        %477 = vmatprep.subr.mxu0 0.0
        %478 = vmatpush1.msra.mxu0 0.0
        %479 = vmatprep.subr.mxu0 0.0
        %480 = vmatpush1.msra.mxu0 0.0
        %481 = vmatprep.subr.mxu0 0.0
        %482 = vmatpush1.msra.mxu0 0.0
        %483 = vmatprep.subr.mxu0 0.0
        %484 = vmatpush1.msra.mxu0 0.0
        %485 = vmatprep.subr.mxu0 0.0
        %486 = vmatpush1.msra.mxu0 0.0
        %487 = vmatprep.subr.mxu0 0.0
        %488 = vmatpush1.msra.mxu0 0.0
        %489 = vmatprep.subr.mxu0 0.0
        %490 = vmatpush1.msra.mxu0 0.0
        %491 = vmatprep.subr.mxu0 0.0
        %492 = vmatpush1.msra.mxu0 0.0
        %493 = vmatprep.subr.mxu0 0.0
        %494 = vmatpush1.msra.mxu0 0.0
        %495 = vmatprep.mubr.f32.mxu0 0.0
        %496 = vmatmul.mubr.f32.gmra.mrb[0].mxu0 %v407
        %v497 = vpop.f32.mrb[0].mxu0
        %v498 = vadd.f32 %v430, %v497
        %v499 = vpop.f32.mrb[0].mxu0
        %500 = vdwg.mxu0
        %v501 = vtanh.pop %v498
        %v502 = vld [vmem:[%s245 + $0x128] sm:$0xff]
        %v503 = vld [vmem:[%s245 + $0x130] sm:$0xff]
        %v504 = vld [vmem:[%s245 + $0x138] sm:$0xff]
        %v505 = vld [vmem:[%s245 + $0x140] sm:$0xff]
        %v506 = vld [vmem:[%s245 + $0x121] sm:$0x1]
        %v507 = vlaneseq
        %v508 = vshrl.u32 %v507, 7
        %v509 = vsub.s32 0, %v508
        %v510 = vrot.slane %v506, %v509
        %vm511 = vcmask 261120
        %v513 = vsel %vm511, %v501, 0
        %515 = vmatprep.subr.mxu0 0.0
        %516 = vmatpush1.msra.mxu0 %v502
        %517 = vmatprep.subr.mxu0 0.0
        %518 = vmatpush1.msra.mxu0 %v503
        %519 = vmatprep.subr.mxu0 0.0
        %520 = vmatpush1.msra.mxu0 %v504
        %521 = vmatprep.subr.mxu0 0.0
        %522 = vmatpush1.msra.mxu0 %v505
        %523 = vmatprep.subr.mxu0 0.0
        %524 = vmatpush1.msra.mxu0 0.0
        %525 = vmatprep.subr.mxu0 0.0
        %526 = vmatpush1.msra.mxu0 0.0
        %527 = vmatprep.subr.mxu0 0.0
        %528 = vmatpush1.msra.mxu0 0.0
        %529 = vmatprep.subr.mxu0 0.0
        %530 = vmatpush1.msra.mxu0 0.0
        %531 = vmatprep.subr.mxu0 0.0
        %532 = vmatpush1.msra.mxu0 0.0
        %533 = vmatprep.subr.mxu0 0.0
        %534 = vmatpush1.msra.mxu0 0.0
        %535 = vmatprep.subr.mxu0 0.0
        %536 = vmatpush1.msra.mxu0 0.0
        %537 = vmatprep.subr.mxu0 0.0
        %538 = vmatpush1.msra.mxu0 0.0
        %539 = vmatprep.subr.mxu0 0.0
        %540 = vmatpush1.msra.mxu0 0.0
        %541 = vmatprep.subr.mxu0 0.0
        %542 = vmatpush1.msra.mxu0 0.0
        %543 = vmatprep.subr.mxu0 0.0
        %544 = vmatpush1.msra.mxu0 0.0
        %545 = vmatprep.subr.mxu0 0.0
        %546 = vmatpush1.msra.mxu0 0.0
        %547 = vmatprep.subr.mxu0 0.0
        %548 = vmatpush1.msra.mxu0 0.0
        %549 = vmatprep.subr.mxu0 0.0
        %550 = vmatpush1.msra.mxu0 0.0
        %551 = vmatprep.subr.mxu0 0.0
        %552 = vmatpush1.msra.mxu0 0.0
        %553 = vmatprep.subr.mxu0 0.0
        %554 = vmatpush1.msra.mxu0 0.0
        %555 = vmatprep.subr.mxu0 0.0
        %556 = vmatpush1.msra.mxu0 0.0
        %557 = vmatprep.subr.mxu0 0.0
        %558 = vmatpush1.msra.mxu0 0.0
        %559 = vmatprep.subr.mxu0 0.0
        %560 = vmatpush1.msra.mxu0 0.0
        %561 = vmatprep.subr.mxu0 0.0
        %562 = vmatpush1.msra.mxu0 0.0
        %563 = vmatprep.subr.mxu0 0.0
        %564 = vmatpush1.msra.mxu0 0.0
        %565 = vmatprep.subr.mxu0 0.0
        %566 = vmatpush1.msra.mxu0 0.0
        %567 = vmatprep.subr.mxu0 0.0
        %568 = vmatpush1.msra.mxu0 0.0
        %569 = vmatprep.subr.mxu0 0.0
        %570 = vmatpush1.msra.mxu0 0.0
        %571 = vmatprep.subr.mxu0 0.0
        %572 = vmatpush1.msra.mxu0 0.0
        %573 = vmatprep.subr.mxu0 0.0
        %574 = vmatpush1.msra.mxu0 0.0
        %575 = vmatprep.subr.mxu0 0.0
        %576 = vmatpush1.msra.mxu0 0.0
        %577 = vmatprep.subr.mxu0 0.0
        %578 = vmatpush1.msra.mxu0 0.0
        %579 = vmatprep.mubr.f32.mxu0 0.0
        %580 = vmatmul.mubr.f32.gmra.mrb[0].mxu0 %v513
        %v581 = vpop.f32.mrb[0].mxu0
        %v582 = vadd.f32 %v510, %v581
        %v583 = vpop.f32.mrb[0].mxu0
        %584 = vdwg.mxu0
        %v585 = vmul.f32 %v582, 0.5
        %v586 = vmul.f32 %v585, 1.442695
        %v587 = vpow.pop %v586
        %v588 = vld [vmem:[%s301] sm:$0x3]
        %590 = vrot.lane.b32.xlu0 %v588, 8
        %v591 = vpop.permute.xlu0 %590
        %v593 = vmul.f32 %v587, %v591
        %595 = vrot.lane.b32.xlu0 %v593, 120
        %v596 = vpop.permute.xlu0 %595
        %v598 = vadd.f32 %v582, %v596
        %v599 = vld [vmem:[%s292 + $0x10] sm:$0xff]
        %v600 = vld [vmem:[%s292 + $0x18] sm:$0xff]
        %v601 = vld [vmem:[%s292 + $0x20] sm:$0xff]
        %v602 = vld [vmem:[%s292 + $0x28] sm:$0xff]
        %v603 = vld [vmem:[%s292 + $0x30] sm:$0xff]
        %v604 = vld [vmem:[%s292 + $0x38] sm:$0xff]
        %v605 = vld [vmem:[%s292 + $0x40] sm:$0xff]
        %v606 = vld [vmem:[%s292 + $0x48] sm:$0xff]
        %v607 = vld [vmem:[%s297] sm:$0xff]
        %v608 = vld [vmem:[%s297 + $0x8] sm:$0xff]
        %v609 = vld [vmem:[%s297 + $0x10] sm:$0xff]
        %v610 = vld [vmem:[%s297 + $0x18] sm:$0xff]
        %v611 = vld [vmem:[%s297 + $0x20] sm:$0xff]
        %v612 = vld [vmem:[%s297 + $0x28] sm:$0xff]
        %v613 = vld [vmem:[%s297 + $0x30] sm:$0xff]
        %v614 = vld [vmem:[%s297 + $0x38] sm:$0xff]
        %615 = vset.pattern.permute.xlu0 0
        %616 = vperm.xlu0 %615, %v599
        %v617 = vpop.permute.xlu0 %616
        %618 = vset.pattern.permute.xlu0 0
        %619 = vperm.xlu0 %618, %v600
        %v620 = vpop.permute.xlu0 %619
        %621 = vset.pattern.permute.xlu0 0
        %622 = vperm.xlu0 %621, %v601
        %v623 = vpop.permute.xlu0 %622
        %624 = vset.pattern.permute.xlu0 0
        %625 = vperm.xlu0 %624, %v602
        %v626 = vpop.permute.xlu0 %625
        %vm627 = vcmp.eq.s32.totalorder %v312, %v617
        %vm628 = vcmp.eq.s32.totalorder %v312, %v620
        %vm629 = vcmp.eq.s32.totalorder %v312, %v623
        %vm630 = vcmp.eq.s32.totalorder %v312, %v626
        %v631 = vsel %vm627, 1, 0
        %v632 = vsel %vm628, 1, 0
        %v633 = vsel %vm629, 1, 0
        %v634 = vsel %vm630, 1, 0
        %v635 = vcvt.s32.f32 %v631
        %v636 = vcvt.s32.f32 %v632
        %v637 = vcvt.s32.f32 %v633
        %v638 = vcvt.s32.f32 %v634
        %v639 = vld [vmem:[%s245 + $0x80] sm:$0xff]
        %v640 = vld [vmem:[%s245 + $0x88] sm:$0xff]
        %v641 = vld [vmem:[%s245 + $0x90] sm:$0xff]
        %v642 = vld [vmem:[%s245 + $0x98] sm:$0xff]
        %v643 = vld [vmem:[%s245 + $0xa0] sm:$0xff]
        %v644 = vld [vmem:[%s245 + $0xa8] sm:$0xff]
        %v645 = vld [vmem:[%s245 + $0xb0] sm:$0xff]
        %v646 = vld [vmem:[%s245 + $0xb8] sm:$0xff]
        %v647 = vld [vmem:[%s245 + $0xc0] sm:$0xff]
        %v648 = vld [vmem:[%s245 + $0xc8] sm:$0xff]
        %v649 = vld [vmem:[%s245 + $0xd0] sm:$0xff]
        %v650 = vld [vmem:[%s245 + $0xd8] sm:$0xff]
        %v651 = vld [vmem:[%s245 + $0xe0] sm:$0xff]
        %v652 = vld [vmem:[%s245 + $0xe8] sm:$0xff]
        %v653 = vld [vmem:[%s245 + $0xf0] sm:$0xff]
        %v654 = vld [vmem:[%s245 + $0xf8] sm:$0xff]
        %655 = vmatprep.subr.mxu0 0.0
        %656 = vmatpush1.msra.mxu0 %v639
        %657 = vmatprep.subr.mxu0 0.0
        %658 = vmatpush1.msra.mxu0 %v640
        %659 = vmatprep.subr.mxu0 0.0
        %660 = vmatpush1.msra.mxu0 %v641
        %661 = vmatprep.subr.mxu0 0.0
        %662 = vmatpush1.msra.mxu0 %v642
        %663 = vmatprep.subr.mxu0 0.0
        %664 = vmatpush1.msra.mxu0 %v643
        %665 = vmatprep.subr.mxu0 0.0
        %666 = vmatpush1.msra.mxu0 %v644
        %667 = vmatprep.subr.mxu0 0.0
        %668 = vmatpush1.msra.mxu0 %v645
        %669 = vmatprep.subr.mxu0 0.0
        %670 = vmatpush1.msra.mxu0 %v646
        %671 = vmatprep.subr.mxu0 0.0
        %672 = vmatpush1.msra.mxu0 %v647
        %673 = vmatprep.subr.mxu0 0.0
        %674 = vmatpush1.msra.mxu0 %v648
        %675 = vmatprep.subr.mxu0 0.0
        %676 = vmatpush1.msra.mxu0 %v649
        %677 = vmatprep.subr.mxu0 0.0
        %678 = vmatpush1.msra.mxu0 %v650
        %679 = vmatprep.subr.mxu0 0.0
        %680 = vmatpush1.msra.mxu0 %v651
        %681 = vmatprep.subr.mxu0 0.0
        %682 = vmatpush1.msra.mxu0 %v652
        %683 = vmatprep.subr.mxu0 0.0
        %684 = vmatpush1.msra.mxu0 %v653
        %685 = vmatprep.subr.mxu0 0.0
        %686 = vmatpush1.msra.mxu0 %v654
        %687 = vmatprep.subr.mxu0 0.0
        %688 = vmatpush1.msra.mxu0 0.0
        %689 = vmatprep.subr.mxu0 0.0
        %690 = vmatpush1.msra.mxu0 0.0
        %691 = vmatprep.subr.mxu0 0.0
        %692 = vmatpush1.msra.mxu0 0.0
        %693 = vmatprep.subr.mxu0 0.0
        %694 = vmatpush1.msra.mxu0 0.0
        %695 = vmatprep.subr.mxu0 0.0
        %696 = vmatpush1.msra.mxu0 0.0
        %697 = vmatprep.subr.mxu0 0.0
        %698 = vmatpush1.msra.mxu0 0.0
        %699 = vmatprep.subr.mxu0 0.0
        %700 = vmatpush1.msra.mxu0 0.0
        %701 = vmatprep.subr.mxu0 0.0
        %702 = vmatpush1.msra.mxu0 0.0
        %703 = vmatprep.subr.mxu0 0.0
        %704 = vmatpush1.msra.mxu0 0.0
        %705 = vmatprep.subr.mxu0 0.0
        %706 = vmatpush1.msra.mxu0 0.0
        %707 = vmatprep.subr.mxu0 0.0
        %708 = vmatpush1.msra.mxu0 0.0
        %709 = vmatprep.subr.mxu0 0.0
        %710 = vmatpush1.msra.mxu0 0.0
        %711 = vmatprep.subr.mxu0 0.0
        %712 = vmatpush1.msra.mxu0 0.0
        %713 = vmatprep.subr.mxu0 0.0
        %714 = vmatpush1.msra.mxu0 0.0
        %715 = vmatprep.subr.mxu0 0.0
        %716 = vmatpush1.msra.mxu0 0.0
        %717 = vmatprep.subr.mxu0 0.0
        %718 = vmatpush1.msra.mxu0 0.0
        %719 = vmatprep.mubr.f32.mxu0 0.0
        %720 = vmatmul.mubr.f32.gmra.mrb[0].mxu0 %v635
        %v721 = vpop.f32.mrb[0].mxu0
        %v722 = vadd.f32 0.0, %v721
        %v723 = vpop.f32.mrb[0].mxu0
        %724 = vmatprep.mubr.f32.mxu0 0.0
        %725 = vmatmul.mubr.f32.gmra.mrb[0].mxu0 %v636
        %v726 = vpop.f32.mrb[0].mxu0
        %v727 = vadd.f32 0.0, %v726
        %v728 = vpop.f32.mrb[0].mxu0
        %729 = vmatprep.mubr.f32.mxu0 0.0
        %730 = vmatmul.mubr.f32.gmra.mrb[0].mxu0 %v637
        %v731 = vpop.f32.mrb[0].mxu0
        %v732 = vadd.f32 0.0, %v731
        %v733 = vpop.f32.mrb[0].mxu0
        %734 = vmatprep.mubr.f32.mxu0 0.0
        %735 = vmatmul.mubr.f32.gmra.mrb[0].mxu0 %v638
        %v736 = vpop.f32.mrb[0].mxu0
        %v737 = vadd.f32 0.0, %v736
        %v738 = vpop.f32.mrb[0].mxu0
        %739 = vdwg.mxu0
        %741 = vset.pattern.permute.xlu0 0
        %742 = vperm.xlu0 %741, %v607
        %v743 = vpop.permute.xlu0 %742
        %746 = vset.pattern.permute.xlu0 0
        %747 = vperm.xlu0 %746, %v608
        %v748 = vpop.permute.xlu0 %747
        %751 = vset.pattern.permute.xlu0 0
        %752 = vperm.xlu0 %751, %v609
        %v753 = vpop.permute.xlu0 %752
        %756 = vset.pattern.permute.xlu0 0
        %757 = vperm.xlu0 %756, %v610
        %v758 = vpop.permute.xlu0 %757
        %v760 = vmul.f32 %v722, %v743
        %v761 = vmul.f32 %v727, %v748
        %v762 = vmul.f32 %v732, %v753
        %v763 = vmul.f32 %v737, %v758
        %v764 = vld [vmem:[%s245 + $0x148] sm:$0xff]
        %vm765 = vcmask 64512
        %v767 = vsel %vm765, %v598, 0
        %769 = vmatprep.subr.mxu0 0.0
        %770 = vmatpush1.msra.mxu0 %v764
        %771 = vmatprep.subr.mxu0 0.0
        %772 = vmatpush1.msra.mxu0 0.0
        %773 = vmatprep.subr.mxu0 0.0
        %774 = vmatpush1.msra.mxu0 0.0
        %775 = vmatprep.subr.mxu0 0.0
        %776 = vmatpush1.msra.mxu0 0.0
        %777 = vmatprep.subr.mxu0 0.0
        %778 = vmatpush1.msra.mxu0 0.0
        %779 = vmatprep.subr.mxu0 0.0
        %780 = vmatpush1.msra.mxu0 0.0
        %781 = vmatprep.subr.mxu0 0.0
        %782 = vmatpush1.msra.mxu0 0.0
        %783 = vmatprep.subr.mxu0 0.0
        %784 = vmatpush1.msra.mxu0 0.0
        %785 = vmatprep.subr.mxu0 0.0
        %786 = vmatpush1.msra.mxu0 0.0
        %787 = vmatprep.subr.mxu0 0.0
        %788 = vmatpush1.msra.mxu0 0.0
        %789 = vmatprep.subr.mxu0 0.0
        %790 = vmatpush1.msra.mxu0 0.0
        %791 = vmatprep.subr.mxu0 0.0
        %792 = vmatpush1.msra.mxu0 0.0
        %793 = vmatprep.subr.mxu0 0.0
        %794 = vmatpush1.msra.mxu0 0.0
        %795 = vmatprep.subr.mxu0 0.0
        %796 = vmatpush1.msra.mxu0 0.0
        %797 = vmatprep.subr.mxu0 0.0
        %798 = vmatpush1.msra.mxu0 0.0
        %799 = vmatprep.subr.mxu0 0.0
        %800 = vmatpush1.msra.mxu0 0.0
        %801 = vmatprep.subr.mxu0 0.0
        %802 = vmatpush1.msra.mxu0 0.0
        %803 = vmatprep.subr.mxu0 0.0
        %804 = vmatpush1.msra.mxu0 0.0
        %805 = vmatprep.subr.mxu0 0.0
        %806 = vmatpush1.msra.mxu0 0.0
        %807 = vmatprep.subr.mxu0 0.0
        %808 = vmatpush1.msra.mxu0 0.0
        %809 = vmatprep.subr.mxu0 0.0
        %810 = vmatpush1.msra.mxu0 0.0
        %811 = vmatprep.subr.mxu0 0.0
        %812 = vmatpush1.msra.mxu0 0.0
        %813 = vmatprep.subr.mxu0 0.0
        %814 = vmatpush1.msra.mxu0 0.0
        %815 = vmatprep.subr.mxu0 0.0
        %816 = vmatpush1.msra.mxu0 0.0
        %817 = vmatprep.subr.mxu0 0.0
        %818 = vmatpush1.msra.mxu0 0.0
        %819 = vmatprep.subr.mxu0 0.0
        %820 = vmatpush1.msra.mxu0 0.0
        %821 = vmatprep.subr.mxu0 0.0
        %822 = vmatpush1.msra.mxu0 0.0
        %823 = vmatprep.subr.mxu0 0.0
        %824 = vmatpush1.msra.mxu0 0.0
        %825 = vmatprep.subr.mxu0 0.0
        %826 = vmatpush1.msra.mxu0 0.0
        %827 = vmatprep.subr.mxu0 0.0
        %828 = vmatpush1.msra.mxu0 0.0
        %829 = vmatprep.subr.mxu0 0.0
        %830 = vmatpush1.msra.mxu0 0.0
        %831 = vmatprep.subr.mxu0 0.0
        %832 = vmatpush1.msra.mxu0 0.0
        %833 = vmatprep.mubr.f32.mxu0 0.0
        %834 = vmatmul.mubr.f32.gmra.mrb[0].mxu0 %v767
        %v835 = vpop.f32.mrb[0].mxu0
        %v836 = vadd.f32 0.0, %v835
        %v837 = vpop.f32.mrb[0].mxu0
        %838 = vdwg.mxu0
        %v839 = vlaneseq
        %v840 = vshrl.u32 %v839, 7
        %v841 = vsub.s32 0, %v840
        %v842 = vrot.slane %v836, %v841
        %v843 = vlaneseq
        %v844 = vshrl.u32 %v843, 7
        %v845 = vsub.s32 1, %v844
        %v846 = vrot.slane %v836, %v845
        %v847 = vld [vmem:[%s245 + $0x122] sm:$0x1]
        %v848 = vadd.f32 %v760, %v842
        %v849 = vadd.f32 %v761, %v842
        %v850 = vadd.f32 %v762, %v846
        %v851 = vadd.f32 %v763, %v846
        %v852 = vlaneseq
        %v853 = vshrl.u32 %v852, 7
        %v854 = vsub.s32 0, %v853
        %v855 = vrot.slane %v847, %v854
        %v856 = vadd.f32 %v848, %v855
        %v857 = vadd.f32 %v849, %v855
        %v858 = vadd.f32 %v850, %v855
        %v859 = vadd.f32 %v851, %v855
        %v860 = vtanh.pop %v856
        %v861 = vtanh.pop %v857
        %v862 = vtanh.pop %v858
        %v863 = vtanh.pop %v859
        %v864 = vld [vmem:[%s245 + $0x100] sm:$0xff]
        %v865 = vld [vmem:[%s245 + $0x108] sm:$0xff]
        %v866 = vld [vmem:[%s245 + $0x110] sm:$0xff]
        %v867 = vld [vmem:[%s245 + $0x118] sm:$0xff]
        %v868 = vld [vmem:[%s245 + $0x123] sm:$0x1]
        %v869 = vlaneseq
        %v870 = vshrl.u32 %v869, 7
        %v871 = vsub.s32 0, %v870
        %v872 = vrot.slane %v868, %v871
        %v874 = vsel %vm511, %v860, 0
        %v877 = vsel %vm511, %v861, 0
        %v880 = vsel %vm511, %v862, 0
        %v883 = vsel %vm511, %v863, 0
        %885 = vmatprep.subr.mxu0 0.0
        %886 = vmatpush1.msra.mxu0 %v864
        %887 = vmatprep.subr.mxu0 0.0
        %888 = vmatpush1.msra.mxu0 %v865
        %889 = vmatprep.subr.mxu0 0.0
        %890 = vmatpush1.msra.mxu0 %v866
        %891 = vmatprep.subr.mxu0 0.0
        %892 = vmatpush1.msra.mxu0 %v867
        %893 = vmatprep.subr.mxu0 0.0
        %894 = vmatpush1.msra.mxu0 0.0
        %895 = vmatprep.subr.mxu0 0.0
        %896 = vmatpush1.msra.mxu0 0.0
        %897 = vmatprep.subr.mxu0 0.0
        %898 = vmatpush1.msra.mxu0 0.0
        %899 = vmatprep.subr.mxu0 0.0
        %900 = vmatpush1.msra.mxu0 0.0
        %901 = vmatprep.subr.mxu0 0.0
        %902 = vmatpush1.msra.mxu0 0.0
        %903 = vmatprep.subr.mxu0 0.0
        %904 = vmatpush1.msra.mxu0 0.0
        %905 = vmatprep.subr.mxu0 0.0
        %906 = vmatpush1.msra.mxu0 0.0
        %907 = vmatprep.subr.mxu0 0.0
        %908 = vmatpush1.msra.mxu0 0.0
        %909 = vmatprep.subr.mxu0 0.0
        %910 = vmatpush1.msra.mxu0 0.0
        %911 = vmatprep.subr.mxu0 0.0
        %912 = vmatpush1.msra.mxu0 0.0
        %913 = vmatprep.subr.mxu0 0.0
        %914 = vmatpush1.msra.mxu0 0.0
        %915 = vmatprep.subr.mxu0 0.0
        %916 = vmatpush1.msra.mxu0 0.0
        %917 = vmatprep.subr.mxu0 0.0
        %918 = vmatpush1.msra.mxu0 0.0
        %919 = vmatprep.subr.mxu0 0.0
        %920 = vmatpush1.msra.mxu0 0.0
        %921 = vmatprep.subr.mxu0 0.0
        %922 = vmatpush1.msra.mxu0 0.0
        %923 = vmatprep.subr.mxu0 0.0
        %924 = vmatpush1.msra.mxu0 0.0
        %925 = vmatprep.subr.mxu0 0.0
        %926 = vmatpush1.msra.mxu0 0.0
        %927 = vmatprep.subr.mxu0 0.0
        %928 = vmatpush1.msra.mxu0 0.0
        %929 = vmatprep.subr.mxu0 0.0
        %930 = vmatpush1.msra.mxu0 0.0
        %931 = vmatprep.subr.mxu0 0.0
        %932 = vmatpush1.msra.mxu0 0.0
        %933 = vmatprep.subr.mxu0 0.0
        %934 = vmatpush1.msra.mxu0 0.0
        %935 = vmatprep.subr.mxu0 0.0
        %936 = vmatpush1.msra.mxu0 0.0
        %937 = vmatprep.subr.mxu0 0.0
        %938 = vmatpush1.msra.mxu0 0.0
        %939 = vmatprep.subr.mxu0 0.0
        %940 = vmatpush1.msra.mxu0 0.0
        %941 = vmatprep.subr.mxu0 0.0
        %942 = vmatpush1.msra.mxu0 0.0
        %943 = vmatprep.subr.mxu0 0.0
        %944 = vmatpush1.msra.mxu0 0.0
        %945 = vmatprep.subr.mxu0 0.0
        %946 = vmatpush1.msra.mxu0 0.0
        %947 = vmatprep.subr.mxu0 0.0
        %948 = vmatpush1.msra.mxu0 0.0
        %949 = vmatprep.mubr.f32.mxu0 0.0
        %950 = vmatmul.mubr.f32.gmra.mrb[0].mxu0 %v874
        %v951 = vpop.f32.mrb[0].mxu0
        %v952 = vadd.f32 %v872, %v951
        %v953 = vpop.f32.mrb[0].mxu0
        %954 = vmatprep.mubr.f32.mxu0 0.0
        %955 = vmatmul.mubr.f32.gmra.mrb[0].mxu0 %v877
        %v956 = vpop.f32.mrb[0].mxu0
        %v957 = vadd.f32 %v872, %v956
        %v958 = vpop.f32.mrb[0].mxu0
        %959 = vmatprep.mubr.f32.mxu0 0.0
        %960 = vmatmul.mubr.f32.gmra.mrb[0].mxu0 %v880
        %v961 = vpop.f32.mrb[0].mxu0
        %v962 = vadd.f32 %v872, %v961
        %v963 = vpop.f32.mrb[0].mxu0
        %964 = vmatprep.mubr.f32.mxu0 0.0
        %965 = vmatmul.mubr.f32.gmra.mrb[0].mxu0 %v883
        %v966 = vpop.f32.mrb[0].mxu0
        %v967 = vadd.f32 %v872, %v966
        %v968 = vpop.f32.mrb[0].mxu0
        %969 = vdwg.mxu0
        %970 = vmax.xlane.f32.xlu0 %v952
        %v971 = vpop.xlane.xlu0 %970
        %972 = vmax.xlane.f32.xlu0 %v957
        %v973 = vpop.xlane.xlu0 %972
        %974 = vmax.xlane.f32.xlu0 %v962
        %v975 = vpop.xlane.xlu0 %974
        %976 = vmax.xlane.f32.xlu0 %v967
        %v977 = vpop.xlane.xlu0 %976
        %v978 = vsub.f32 %v952, %v971
        %v979 = vsub.f32 %v957, %v973
        %v980 = vsub.f32 %v962, %v975
        %v981 = vsub.f32 %v967, %v977
        %v982 = vmul.f32 %v978, 1.442695
        %v983 = vpow.pop %v982
        %v984 = vmul.f32 %v979, 1.442695
        %v985 = vpow.pop %v984
        %v986 = vmul.f32 %v980, 1.442695
        %v987 = vpow.pop %v986
        %v988 = vmul.f32 %v981, 1.442695
        %v989 = vpow.pop %v988
        %990 = vadd.xlane.f32.xlu0 %v983
        %v991 = vpop.xlane.xlu0 %990
        %992 = vadd.xlane.f32.xlu0 %v985
        %v993 = vpop.xlane.xlu0 %992
        %994 = vadd.xlane.f32.xlu0 %v987
        %v995 = vpop.xlane.xlu0 %994
        %996 = vadd.xlane.f32.xlu0 %v989
        %v997 = vpop.xlane.xlu0 %996
        %v998 = vlog2.pop %v991
        %v999 = vmul.f32 %v998, 0.6931472
        %v1000 = vlog2.pop %v993
        %v1001 = vmul.f32 %v1000, 0.6931472
        %v1002 = vlog2.pop %v995
        %v1003 = vmul.f32 %v1002, 0.6931472
        %v1004 = vlog2.pop %v997
        %v1005 = vmul.f32 %v1004, 0.6931472
        %v1006 = vadd.f32 %v999, %v971
        %v1007 = vadd.f32 %v1001, %v973
        %v1008 = vadd.f32 %v1003, %v975
        %v1009 = vadd.f32 %v1005, %v977
        %1010 = vset.pattern.permute.xlu0 0
        %1011 = vperm.xlu0 %1010, %v603
        %v1012 = vpop.permute.xlu0 %1011
        %1013 = vset.pattern.permute.xlu0 0
        %1014 = vperm.xlu0 %1013, %v604
        %v1015 = vpop.permute.xlu0 %1014
        %1016 = vset.pattern.permute.xlu0 0
        %1017 = vperm.xlu0 %1016, %v605
        %v1018 = vpop.permute.xlu0 %1017
        %1019 = vset.pattern.permute.xlu0 0
        %1020 = vperm.xlu0 %1019, %v606
        %v1021 = vpop.permute.xlu0 %1020
        %vm1022 = vcmp.eq.s32.totalorder %v312, %v1012
        %vm1023 = vcmp.eq.s32.totalorder %v312, %v1015
        %vm1024 = vcmp.eq.s32.totalorder %v312, %v1018
        %vm1025 = vcmp.eq.s32.totalorder %v312, %v1021
        %v1026 = vsel %vm1022, %v952, 0.0
        %v1027 = vsel %vm1023, %v957, 0.0
        %v1028 = vsel %vm1024, %v962, 0.0
        %v1029 = vsel %vm1025, %v967, 0.0
        %1030 = vadd.xlane.f32.xlu0 %v1026
        %v1031 = vpop.xlane.xlu0 %1030
        %1032 = vadd.xlane.f32.xlu0 %v1027
        %v1033 = vpop.xlane.xlu0 %1032
        %1034 = vadd.xlane.f32.xlu0 %v1028
        %v1035 = vpop.xlane.xlu0 %1034
        %1036 = vadd.xlane.f32.xlu0 %v1029
        %v1037 = vpop.xlane.xlu0 %1036
        %v1038 = vsub.f32 %v1006, %v1031
        %v1039 = vsub.f32 %v1007, %v1033
        %v1040 = vsub.f32 %v1008, %v1035
        %v1041 = vsub.f32 %v1009, %v1037
        %v1042 = vmul.f32 %v611, %v1038
        %v1043 = vmul.f32 %v612, %v1039
        %v1044 = vmul.f32 %v613, %v1040
        %v1045 = vmul.f32 %v614, %v1041
        %vm1046 = vcmask 7168
        %v1047 = vsel %vm1046, %v1042, 0.0
        %v1048 = vsel %vm1046, %v1043, 0.0
        %v1049 = vadd.f32 %v1047, %v1048
        %v1050 = vsel %vm1046, %v1044, 0.0
        %v1051 = vadd.f32 %v1049, %v1050
        %v1052 = vsel %vm1046, %v1045, 0.0
        %v1053 = vadd.f32 %v1051, %v1052
        %v1054 = vrot.slane %v1053, 4
        %v1055 = vadd.f32 %v1053, %v1054
        %v1056 = vrot.slane %v1055, 2
        %v1057 = vadd.f32 %v1055, %v1056
        %v1058 = vrot.slane %v1057, 1
        %v1059 = vadd.f32 %v1057, %v1058
        %v1060 = vmul.f32 %v1059, 0.055555556
        %v1061 = vmul.f32 %v582, %v582
        %1063 = vrot.lane.b32.xlu0 %v1061, 8
        %v1064 = vpop.permute.xlu0 %1063
        %v1066 = vsub.f32 %v582, %v1064
        %v1067 = vmul.f32 %v582, 1.442695
        %v1068 = vpow.pop %v1067
        %v1069 = vsub.f32 %v1066, %v1068
        %v1070 = vadd.f32 %v1069, 1.0
        %1072 = vrot.lane.b32.xlu0 %v1070, 120
        %v1073 = vpop.permute.xlu0 %1072
        %vm1075 = vcmask 58368
        %v1076 = vsel %vm1075, %v1073, 0.0
        %1077 = vadd.xlane.f32.xlu0 %v1076
        %v1078 = vpop.xlane.xlu0 %1077
        %v1079 = vmul.f32 %v1078, -0.5
        %vm1080 = vcmask 1041408
        %v1081 = vsel %vm1080, %v1079, 0.0
        %v1082 = vrot.slane %v1081, 4
        %v1083 = vadd.f32 %v1081, %v1082
        %v1084 = vrot.slane %v1083, 2
        %v1085 = vadd.f32 %v1083, %v1084
        %v1086 = vrot.slane %v1085, 1
        %v1087 = vadd.f32 %v1085, %v1086
        %v1088 = vmul.f32 %v1087, 0.5
        %v1089 = vsel %vm1046, %v1060, %v1088
        %vm1090 = vcmask 8192
        %1091 = vst.msk [vmem:[%s304] sm:$0x1] %vm1090, %v1089
        %vm1092 = vcmask 123904
        %1093 = vst.msk [vmem:[%s308] sm:$0x3] %vm1092, %v582
        %p1094 = scmp.lt.s32.totalorder %s20, 1
        %s1095 = scalar_select %p1094, %s20, 1
        %s1096 = scalar_lea.vmem %s4, %s1095
        %p1097 = scmp.lt.s32.totalorder %s20, 1
        %s1098 = scalar_select %p1097, %s20, 1
        %s1099 = smul.addr %s1098, 2
        %s1100 = scalar_lea.vmem %s5, %s1099
        // Predicated region
        $region41: #{cdvae_forward.1} parent=35 // pred_check
          %p1101 = pneg %p142
        $region42: #{cdvae_forward.1} parent=35 // pred_check_branch
          %1103 = sbr.rel (%p1101) target = $region44
        $region43: #{cdvae_forward.1} parent=35 // pred_region
          _
        $region44: #{cdvae_forward.1} parent=35 // pred_fallthru
          _
        // Predicated region
        $region45: #{cdvae_forward.1} parent=35 // pred_check
          %p1104 = pneg %p168
        $region46: #{cdvae_forward.1} parent=35 // pred_check_branch
          %1106 = sbr.rel (%p1104) target = $region48
        $region47: #{cdvae_forward.1} parent=35 // pred_region
          _
        $region48: #{cdvae_forward.1} parent=35 // pred_fallthru
          _
      $region36: #{cdvae_forward.1} parent=5 // pred_fallthru
        _
      %p1107 = scmp.le.s32.totalorder 2, %s15
      // Predicated region
      $region49: #{cdvae_forward.1} parent=5 // pred_check
        %p1108 = pneg %p1107
      $region50: #{cdvae_forward.1} parent=5 // pred_check_branch
        %1110 = sbr.rel (%p1108) target = $region52
      $region51: #{cdvae_forward.1} parent=5 // pred_region
        %s1111 = ssub.s32 %s15, 2
        // Predicated region
        $region53: #{cdvae_forward.1} parent=51 // pred_check
          %p1112 = pneg %p148
        $region54: #{cdvae_forward.1} parent=51 // pred_check_branch
          %1114 = sbr.rel (%p1112) target = $region56
        $region55: #{cdvae_forward.1} parent=51 // pred_region
          %p1115 = scmp.lt.s32.totalorder %s21, 1
          %s1116 = scalar_select %p1115, %s21, 1
          %s1117 = scalar_lea.vmem %s4, %s1116
        $region56: #{cdvae_forward.1} parent=51 // pred_fallthru
          _
        // Predicated region
        $region57: #{cdvae_forward.1} parent=51 // pred_check
          %p1118 = pneg %p174
        $region58: #{cdvae_forward.1} parent=51 // pred_check_branch
          %1120 = sbr.rel (%p1118) target = $region60
        $region59: #{cdvae_forward.1} parent=51 // pred_region
          %p1121 = scmp.lt.s32.totalorder %s21, 1
          %s1122 = scalar_select %p1121, %s21, 1
          %s1123 = smul.addr %s1122, 2
          %s1124 = scalar_lea.vmem %s5, %s1123
        $region60: #{cdvae_forward.1} parent=51 // pred_fallthru
          _
      $region52: #{cdvae_forward.1} parent=5 // pred_fallthru
        _
    $region6: #{cdvae_forward.1} parent=1 // loop_footer
      %s19 = sadd.s32 1, %s15
    $region7: #{cdvae_forward.1} parent=1 // loop_footer_branch
      %14 = sbr.rel target = $region3
    $region8: #{cdvae_forward.1} parent=1 // loop_exit
      _
    %1125 = vsyncpa [#allocation3], 1
    %s1126 = scalar_lea.sflag [#allocation3], 1
    %1127 = vsyncpa %s1126, 1

</llo_original>
